<compile_context>
chip_gen: v7x
topology: tpu7x:2x2x1
jax: 0.10.0
libtpu: 0.0.40
codegen_flags: <defaults>
</compile_context>

<pallas_src>
import math
import functools

import jax
import jax.numpy as jnp
from jax import lax
from jax.experimental import pallas as pl
from jax.experimental.pallas import tpu as pltpu


def _round_up(x, m):
    return ((x + m - 1) // m) * m


def _vmem_limit_bytes():
    # v5e/v6e: 128 MiB physical VMEM per TensorCore; v7x: 64 MiB.  Leave
    # headroom for compiler-internal scratch rather than requesting it all.
    try:
        cap = pltpu.get_tpu_info().vmem_capacity_bytes
    except Exception:
        cap = 128 * 1024 * 1024
    return int(min(cap - 16 * 1024 * 1024, 100 * 1024 * 1024))


def _cross_attention_kernel(
    latent_ref,    # (1, TQ, d_embed)          compute dtype
    context_ref,   # (1, S_KV_pad, d_cross)    compute dtype
    wq_ref,        # (d_embed, d_embed_pad)    compute dtype (scale folded, head-padded)
    bq_ref,        # (1, d_embed_pad)          f32           (scale folded, head-padded)
    wk_ref,        # (d_cross, d_embed_pad)    compute dtype
    bk_ref,        # (1, d_embed_pad)          f32
    wv_ref,        # (d_cross, d_embed_pad)    compute dtype
    bv_ref,        # (1, d_embed_pad)          f32
    wo_ref,        # (d_embed_pad, d_embed)    compute dtype (zero rows at padded d_head)
    bo_ref,        # (1, d_embed)              f32
    out_ref,       # (1, TQ, d_embed)
    k_scr,         # (S_KV_pad, d_embed_pad)   compute dtype
    v_scr,         # (S_KV_pad, d_embed_pad)   compute dtype
    q_scr,         # (TQ, d_embed_pad)         compute dtype
    o_scr,         # (TQ, d_embed_pad)         compute dtype
    *,
    n_heads, d_head_pad, tq, s_kv, s_kv_pad, approx_recip,
):
    qi = pl.program_id(1)
    cdt = latent_ref.dtype  # dtype fed to the MXU (bf16 by default)

    # --- Fused K/V projections: one full-width matmul each, computed once per
    #     batch element and cached in VMEM.  Relies on the qi axis staying
    #     innermost, sequential and "arbitrary" -- do NOT mark it "parallel".
    @pl.when(qi == 0)
    def _():
        ctx = context_ref[0]                                       # (S_KV_pad, d_cross)
        k_all = jnp.dot(ctx, wk_ref[...],
                        preferred_element_type=jnp.float32) + bk_ref[...]
        v_all = jnp.dot(ctx, wv_ref[...],
                        preferred_element_type=jnp.float32) + bv_ref[...]
        k_scr[...] = k_all.astype(cdt)
        v_scr[...] = v_all.astype(cdt)

    # --- Fused Q projection: single matmul with N = d_embed_pad. ---
    x = latent_ref[0]                                              # (TQ, d_embed)
    q_all = (jnp.dot(x, wq_ref[...], preferred_element_type=jnp.float32)
             + bq_ref[...])
    q_scr[...] = q_all.astype(cdt)

    # Additive key-padding bias (0 for real keys, -1e30 for padding); computed
    # once, broadcast-added per head (cheaper than per-head iota/compare/select).
    if s_kv_pad != s_kv:
        mask_bias = jnp.where(
            lax.broadcasted_iota(jnp.int32, (1, s_kv_pad), 1) < s_kv,
            jnp.float32(0.0), jnp.float32(-1e30))
    else:
        mask_bias = None

    # --- Head loop.  All head slices are 128-aligned lane blocks; each head's
    #     result goes straight to the o_scr staging ref (no value accumulator
    #     carried across iterations). ---
    dp = d_head_pad
    for h in range(n_heads):
        lo = h * dp
        q_h = q_scr[:, lo:lo + dp]                                 # (TQ, dp)
        k_h = k_scr[:, lo:lo + dp]                                 # (S_KV_pad, dp)
        v_h = v_scr[:, lo:lo + dp]                                 # (S_KV_pad, dp)

        # scores = q_h @ k_h.T (MXU trans_b, no materialized transpose), f32.
        scores = lax.dot_general(q_h, k_h, (((1,), (1,)), ((), ())),
                                 preferred_element_type=jnp.float32)
        if mask_bias is not None:
            scores = scores + mask_bias

        m = jnp.max(scores, axis=-1, keepdims=True)
        e = jnp.exp(scores - m)                                    # unnormalized probs, f32
        denom = jnp.sum(e, axis=-1, keepdims=True)

        # Deferred normalization: p @ v first, then scale the small (TQ, dp)
        # result.  Approx (EUP) reciprocal on the bf16 path, exact divide on f32.
        o_h = jnp.dot(e.astype(cdt), v_h, preferred_element_type=jnp.float32)
        if approx_recip:
            o_h = o_h * pl.reciprocal(denom, approx=True)
        else:
            o_h = o_h / denom
        o_scr[:, lo:lo + dp] = o_h.astype(cdt)

    # --- Single output projection: contraction K = d_embed_pad (full MXU
    #     depth); accumulation stays inside the MXU instead of a per-head
    #     f32 VMEM read-modify-write. ---
    out = jnp.dot(o_scr[...], wo_ref[...],
                  preferred_element_type=jnp.float32) + bo_ref[...]
    out_ref[0] = out.astype(out_ref.dtype)


def cross_attention(latent, context, params, *, n_heads,
                    compute_dtype=jnp.bfloat16, tq_max=512):
    """latent: (B, S_Q, d_embed); context: (B, S_KV, d_cross)."""
    B, S_Q, d_embed = latent.shape
    Bc, S_KV, d_cross = context.shape
    assert Bc == B and d_embed % n_heads == 0
    d_head = d_embed // n_heads
    d_head_pad = _round_up(d_head, 128)     # lane-aligned per-head column blocks
    d_embed_pad = n_heads * d_head_pad
    scale = 1.0 / math.sqrt(d_head)
    out_dtype = latent.dtype

    wq, bq, wk, bk, wv, bv, wo, bo = params

    def _pad_in_proj(w, b, extra_scale=1.0):
        # PyTorch Linear stores W as (out, in); y = x @ W.T + b.  Split the
        # `out` axis per head and zero-pad d_head -> d_head_pad so each head's
        # columns start at a multiple-of-128 lane offset.
        wt = (w.T * extra_scale).reshape(-1, n_heads, d_head)
        wt = jnp.pad(wt, ((0, 0), (0, 0), (0, d_head_pad - d_head)))
        bt = (b * extra_scale).reshape(n_heads, d_head)
        bt = jnp.pad(bt, ((0, 0), (0, d_head_pad - d_head)))
        return (wt.reshape(-1, d_embed_pad).astype(compute_dtype),
                bt.reshape(1, d_embed_pad).astype(jnp.float32))

    wq_p, bq_p = _pad_in_proj(wq, bq, scale)   # 1/sqrt(d_head) folded into Q
    wk_p, bk_p = _pad_in_proj(wk, bk)
    wv_p, bv_p = _pad_in_proj(wv, bv)

    # Output projection: zero rows at padded d_head positions so padded columns
    # of the staged attention output contribute nothing.
    wo_t = wo.T.reshape(n_heads, d_head, d_embed)
    wo_t = jnp.pad(wo_t, ((0, 0), (0, d_head_pad - d_head), (0, 0)))
    wo_p = wo_t.reshape(d_embed_pad, d_embed).astype(compute_dtype)
    bo_p = bo.reshape(1, d_embed).astype(jnp.float32)

    # Pad keys to a lane-dense multiple of 128 (padded keys masked in-kernel).
    s_kv_pad = _round_up(S_KV, 128)
    if s_kv_pad != S_KV:
        context = jnp.pad(context, ((0, 0), (0, s_kv_pad - S_KV), (0, 0)))

    # Query tiling: single full tile for small S_Q, else tq_max-sized tiles.
    if S_Q <= tq_max:
        tq, s_q_pad = S_Q, S_Q
    else:
        tq = tq_max
        s_q_pad = _round_up(S_Q, tq)
        if s_q_pad != S_Q:
            latent = jnp.pad(latent, ((0, 0), (0, s_q_pad - S_Q), (0, 0)))
    n_q_tiles = s_q_pad // tq

    latent_c = latent.astype(compute_dtype)
    context_c = context.astype(compute_dtype)

    kernel = functools.partial(
        _cross_attention_kernel,
        n_heads=n_heads, d_head_pad=d_head_pad, tq=tq,
        s_kv=S_KV, s_kv_pad=s_kv_pad,
        approx_recip=(compute_dtype != jnp.float32))

    const2 = lambda b, qi: (0, 0)

    out = pl.pallas_call(
        kernel,
        out_shape=jax.ShapeDtypeStruct((B, s_q_pad, d_embed), out_dtype),
        grid_spec=pltpu.PrefetchScalarGridSpec(
            num_scalar_prefetch=0,
            grid=(B, n_q_tiles),
            in_specs=[
                pl.BlockSpec((1, tq, d_embed), lambda b, qi: (b, qi, 0)),       # latent tile
                pl.BlockSpec((1, s_kv_pad, d_cross), lambda b, qi: (b, 0, 0)),  # context
                pl.BlockSpec((d_embed, d_embed_pad), const2),                   # wq (scaled, padded)
                pl.BlockSpec((1, d_embed_pad), const2),                         # bq
                pl.BlockSpec((d_cross, d_embed_pad), const2),                   # wk
                pl.BlockSpec((1, d_embed_pad), const2),                         # bk
                pl.BlockSpec((d_cross, d_embed_pad), const2),                   # wv
                pl.BlockSpec((1, d_embed_pad), const2),                         # bv
                pl.BlockSpec((d_embed_pad, d_embed), const2),                   # wo (padded rows)
                pl.BlockSpec((1, d_embed), const2),                             # bo
            ],
            out_specs=pl.BlockSpec((1, tq, d_embed), lambda b, qi: (b, qi, 0)),
            scratch_shapes=[
                pltpu.VMEM((s_kv_pad, d_embed_pad), compute_dtype),  # K cache (per batch elem)
                pltpu.VMEM((s_kv_pad, d_embed_pad), compute_dtype),  # V cache
                pltpu.VMEM((tq, d_embed_pad), compute_dtype),        # Q staging
                pltpu.VMEM((tq, d_embed_pad), compute_dtype),        # attention-out staging
            ],
        ),
        compiler_params=pltpu.CompilerParams(
            # Batch axis "parallel" (megacore); query-tile axis MUST stay
            # "arbitrary" because K/V scratch is filled at qi == 0 and reused.
            dimension_semantics=("parallel", "arbitrary"),
            vmem_limit_bytes=_vmem_limit_bytes(),
        ),
    )(latent_c, context_c, wq_p, bq_p, wk_p, bk_p, wv_p, bv_p, wo_p, bo_p)

    if s_q_pad != S_Q:
        out = out[:, :S_Q]
    return out


def cross_attention_reference(latent, context, params, *, n_heads):
    """Pure-JAX f32 reference matching the PyTorch forward exactly."""
    wq, bq, wk, bk, wv, bv, wo, bo = params
    B, S_Q, d_embed = latent.shape
    d_head = d_embed // n_heads

    q = latent @ wq.T + bq
    k = context @ wk.T + bk
    v = context @ wv.T + bv

    def split(x):
        return x.reshape(x.shape[0], x.shape[1], n_heads, d_head).transpose(0, 2, 1, 3)

    qh, kh, vh = split(q), split(k), split(v)
    w = jnp.einsum("bhqd,bhkd->bhqk", qh, kh) / math.sqrt(d_head)
    w = jax.nn.softmax(w, axis=-1)
    o = jnp.einsum("bhqk,bhkd->bhqd", w, vh)
    o = o.transpose(0, 2, 1, 3).reshape(B, S_Q, d_embed)
    return o @ wo.T + bo


if __name__ == "__main__":
    # Small shapes consistent with the module's forward.
    B, S_Q, S_KV = 2, 16, 8
    n_heads, d_embed, d_cross = 4, 32, 24

    key = jax.random.PRNGKey(0)
    keys = jax.random.split(key, 10)

    latent = jax.random.normal(keys[0], (B, S_Q, d_embed), dtype=jnp.float32)
    context = jax.random.normal(keys[1], (B, S_KV, d_cross), dtype=jnp.float32)

    # Deterministic parameter init (PyTorch Linear weight layout: (out, in)).
    s = 0.05
    wq = s * jax.random.normal(keys[2], (d_embed, d_embed), dtype=jnp.float32)
    bq = s * jax.random.normal(keys[3], (d_embed,), dtype=jnp.float32)
    wk = s * jax.random.normal(keys[4], (d_embed, d_cross), dtype=jnp.float32)
    bk = s * jax.random.normal(keys[5], (d_embed,), dtype=jnp.float32)
    wv = s * jax.random.normal(keys[6], (d_embed, d_cross), dtype=jnp.float32)
    bv = s * jax.random.normal(keys[7], (d_embed,), dtype=jnp.float32)
    wo = s * jax.random.normal(keys[8], (d_embed, d_embed), dtype=jnp.float32)
    bo = s * jax.random.normal(keys[9], (d_embed,), dtype=jnp.float32)

    params = (wq, bq, wk, bk, wv, bv, wo, bo)

    ref = cross_attention_reference(latent, context, params, n_heads=n_heads)

    # Default (perf) path: bf16 MXU operands, f32 statistics/accumulation.
    out_bf16 = cross_attention(latent, context, params, n_heads=n_heads,
                               compute_dtype=jnp.bfloat16)
    out_bf16 = jax.block_until_ready(out_bf16)
    assert out_bf16.shape == (B, S_Q, d_embed)
    assert jnp.allclose(out_bf16, ref, atol=5e-2, rtol=5e-2), \
        "bf16 kernel mismatch vs reference"

    # f32 path: validates the algorithm (scale folding, fused projections,
    # head padding, key-padding mask) at tight tolerance with exact softmax.
    out_f32 = cross_attention(latent, context, params, n_heads=n_heads,
                              compute_dtype=jnp.float32)
    out_f32 = jax.block_until_ready(out_f32)
    assert jnp.allclose(out_f32, ref, atol=5e-3, rtol=5e-3), \
        "f32 kernel mismatch vs reference"

    print("KERNEL_OK")
</pallas_src>

<mosaic_0001>
module attributes {stable_mosaic.version = 11 : i64} {
  func.func @_cross_attention_kernel(%arg0: i32, %arg1: i32, %arg2: memref<1x16x32xbf16, #tpu.memory_space<vmem>>, %arg3: memref<1x128x24xbf16, #tpu.memory_space<vmem>>, %arg4: memref<32x512xbf16, #tpu.memory_space<vmem>>, %arg5: memref<1x512xf32, #tpu.memory_space<vmem>>, %arg6: memref<24x512xbf16, #tpu.memory_space<vmem>>, %arg7: memref<1x512xf32, #tpu.memory_space<vmem>>, %arg8: memref<24x512xbf16, #tpu.memory_space<vmem>>, %arg9: memref<1x512xf32, #tpu.memory_space<vmem>>, %arg10: memref<512x32xbf16, #tpu.memory_space<vmem>>, %arg11: memref<1x32xf32, #tpu.memory_space<vmem>>, %arg12: memref<1x16x32xf32, #tpu.memory_space<vmem>>, %arg13: memref<128x512xbf16, #tpu.memory_space<vmem>>, %arg14: memref<128x512xbf16, #tpu.memory_space<vmem>>, %arg15: memref<16x512xbf16, #tpu.memory_space<vmem>>, %arg16: memref<16x512xbf16, #tpu.memory_space<vmem>>) attributes {dimension_semantics = [#tpu.dimension_semantics<parallel>, #tpu.dimension_semantics<arbitrary>], iteration_bounds = array<i64: 2, 1>, scalar_prefetch = 0 : i64, scratch_operands = 4 : i64, tpu.core_type = #tpu.core_type<tc>, window_params = [{transform_indices = @transform_0, window_bounds = array<i64: 1, 16, 32>}, {transform_indices = @transform_1, window_bounds = array<i64: 1, 128, 24>}, {pipeline_mode = #tpu.pipeline_mode<synchronous>, transform_indices = @transform_2, window_bounds = array<i64: 32, 512>}, {pipeline_mode = #tpu.pipeline_mode<synchronous>, transform_indices = @transform_3, window_bounds = array<i64: 1, 512>}, {pipeline_mode = #tpu.pipeline_mode<synchronous>, transform_indices = @transform_4, window_bounds = array<i64: 24, 512>}, {pipeline_mode = #tpu.pipeline_mode<synchronous>, transform_indices = @transform_5, window_bounds = array<i64: 1, 512>}, {pipeline_mode = #tpu.pipeline_mode<synchronous>, transform_indices = @transform_6, window_bounds = array<i64: 24, 512>}, {pipeline_mode = #tpu.pipeline_mode<synchronous>, transform_indices = @transform_7, window_bounds = array<i64: 1, 512>}, {pipeline_mode = #tpu.pipeline_mode<synchronous>, transform_indices = @transform_8, window_bounds = array<i64: 512, 32>}, {pipeline_mode = #tpu.pipeline_mode<synchronous>, transform_indices = @transform_9, window_bounds = array<i64: 1, 32>}, {transform_indices = @transform_10, window_bounds = array<i64: 1, 16, 32>}]} {
    %c0_i32 = arith.constant 0 : i32
    %0 = arith.cmpi eq, %arg1, %c0_i32 : i32
    %1 = arith.extui %0 : i1 to i32
    %c0_i32_0 = arith.constant 0 : i32
    %2 = arith.cmpi ne, %1, %c0_i32_0 : i32
    scf.if %2 {
      %c0_66 = arith.constant 0 : index
      %c0_67 = arith.constant 0 : index
      %c0_68 = arith.constant 0 : index
      %107 = vector.load %arg3[%c0_66, %c0_67, %c0_68] : memref<1x128x24xbf16, #tpu.memory_space<vmem>>, vector<1x128x24xbf16>
      %108 = vector.shape_cast %107 : vector<1x128x24xbf16> to vector<128x24xbf16>
      %c0_69 = arith.constant 0 : index
      %c0_70 = arith.constant 0 : index
      %109 = vector.load %arg6[%c0_69, %c0_70] : memref<24x512xbf16, #tpu.memory_space<vmem>>, vector<24x512xbf16>
      %cst_71 = arith.constant dense<0.000000e+00> : vector<128x512xf32>
      %110 = tpu.matmul %108, %109, %cst_71 {dimension_numbers = #tpu.dot_dimension_numbers<[1], [0], [0], [1], [0, 0, 1, 1], [], []>} : vector<128x24xbf16>, vector<24x512xbf16>, vector<128x512xf32> -> vector<128x512xf32>
      %c0_72 = arith.constant 0 : index
      %c0_73 = arith.constant 0 : index
      %111 = vector.load %arg7[%c0_72, %c0_73] : memref<1x512xf32, #tpu.memory_space<vmem>>, vector<1x512xf32>
      %112 = vector.broadcast %111 : vector<1x512xf32> to vector<128x512xf32>
      %113 = arith.addf %110, %112 : vector<128x512xf32>
      %c0_74 = arith.constant 0 : index
      %c0_75 = arith.constant 0 : index
      %114 = vector.load %arg8[%c0_74, %c0_75] : memref<24x512xbf16, #tpu.memory_space<vmem>>, vector<24x512xbf16>
      %cst_76 = arith.constant dense<0.000000e+00> : vector<128x512xf32>
      %115 = tpu.matmul %108, %114, %cst_76 {dimension_numbers = #tpu.dot_dimension_numbers<[1], [0], [0], [1], [0, 0, 1, 1], [], []>} : vector<128x24xbf16>, vector<24x512xbf16>, vector<128x512xf32> -> vector<128x512xf32>
      %c0_77 = arith.constant 0 : index
      %c0_78 = arith.constant 0 : index
      %116 = vector.load %arg9[%c0_77, %c0_78] : memref<1x512xf32, #tpu.memory_space<vmem>>, vector<1x512xf32>
      %117 = vector.broadcast %116 : vector<1x512xf32> to vector<128x512xf32>
      %118 = arith.addf %115, %117 : vector<128x512xf32>
      %119 = arith.truncf %113 : vector<128x512xf32> to vector<128x512xbf16>
      %c0_79 = arith.constant 0 : index
      %c0_80 = arith.constant 0 : index
      %120 = vector.load %arg13[%c0_79, %c0_80] : memref<128x512xbf16, #tpu.memory_space<vmem>>, vector<128x512xbf16>
      tpu.vector_store %arg13[%c0_79, %c0_80], %119 {strides = array<i32>} : memref<128x512xbf16, #tpu.memory_space<vmem>>, vector<128x512xbf16>,
      %121 = arith.truncf %118 : vector<128x512xf32> to vector<128x512xbf16>
      %c0_81 = arith.constant 0 : index
      %c0_82 = arith.constant 0 : index
      %122 = vector.load %arg14[%c0_81, %c0_82] : memref<128x512xbf16, #tpu.memory_space<vmem>>, vector<128x512xbf16>
      tpu.vector_store %arg14[%c0_81, %c0_82], %121 {strides = array<i32>} : memref<128x512xbf16, #tpu.memory_space<vmem>>, vector<128x512xbf16>,
    } else {
    }
    %c0 = arith.constant 0 : index
    %c0_1 = arith.constant 0 : index
    %c0_2 = arith.constant 0 : index
    %3 = vector.load %arg2[%c0, %c0_1, %c0_2] : memref<1x16x32xbf16, #tpu.memory_space<vmem>>, vector<1x16x32xbf16>
    %4 = vector.shape_cast %3 : vector<1x16x32xbf16> to vector<16x32xbf16>
    %c0_3 = arith.constant 0 : index
    %c0_4 = arith.constant 0 : index
    %5 = vector.load %arg4[%c0_3, %c0_4] : memref<32x512xbf16, #tpu.memory_space<vmem>>, vector<32x512xbf16>
    %cst = arith.constant dense<0.000000e+00> : vector<16x512xf32>
    %6 = tpu.matmul %4, %5, %cst {dimension_numbers = #tpu.dot_dimension_numbers<[1], [0], [0], [1], [0, 0, 1, 1], [], []>} : vector<16x32xbf16>, vector<32x512xbf16>, vector<16x512xf32> -> vector<16x512xf32>
    %c0_5 = arith.constant 0 : index
    %c0_6 = arith.constant 0 : index
    %7 = vector.load %arg5[%c0_5, %c0_6] : memref<1x512xf32, #tpu.memory_space<vmem>>, vector<1x512xf32>
    %8 = vector.broadcast %7 : vector<1x512xf32> to vector<16x512xf32>
    %9 = arith.addf %6, %8 : vector<16x512xf32>
    %10 = arith.truncf %9 : vector<16x512xf32> to vector<16x512xbf16>
    %c0_7 = arith.constant 0 : index
    %c0_8 = arith.constant 0 : index
    %11 = vector.load %arg15[%c0_7, %c0_8] : memref<16x512xbf16, #tpu.memory_space<vmem>>, vector<16x512xbf16>
    tpu.vector_store %arg15[%c0_7, %c0_8], %10 {strides = array<i32>} : memref<16x512xbf16, #tpu.memory_space<vmem>>, vector<16x512xbf16>,
    %12 = tpu.iota {dimensions = array<i32: 1>} : vector<1x128xi32>
    %c8_i32 = arith.constant 8 : i32
    %13 = vector.broadcast %c8_i32 : i32 to vector<1x128xi32>
    %14 = arith.cmpi slt, %12, %13 : vector<1x128xi32>
    %cst_9 = arith.constant 0.000000e+00 : f32
    %cst_10 = arith.constant -1.000000e+30 : f32
    %15 = vector.broadcast %cst_9 : f32 to vector<1x128xf32>
    %16 = vector.broadcast %cst_10 : f32 to vector<1x128xf32>
    %17 = arith.select %14, %15, %16 : vector<1x128xi1>, vector<1x128xf32>
    %c0_11 = arith.constant 0 : index
    %c0_12 = arith.constant 0 : index
    %18 = vector.load %arg15[%c0_11, %c0_12] : memref<16x512xbf16, #tpu.memory_space<vmem>>, vector<16x128xbf16>
    %c0_13 = arith.constant 0 : index
    %c0_14 = arith.constant 0 : index
    %19 = vector.load %arg13[%c0_13, %c0_14] : memref<128x512xbf16, #tpu.memory_space<vmem>>, vector<128x128xbf16>
    %c0_15 = arith.constant 0 : index
    %c0_16 = arith.constant 0 : index
    %20 = vector.load %arg14[%c0_15, %c0_16] : memref<128x512xbf16, #tpu.memory_space<vmem>>, vector<128x128xbf16>
    %cst_17 = arith.constant dense<0.000000e+00> : vector<16x128xf32>
    %21 = tpu.matmul %18, %19, %cst_17 {dimension_numbers = #tpu.dot_dimension_numbers<[1], [1], [0], [0], [0, 0, 1, 0], [], []>} : vector<16x128xbf16>, vector<128x128xbf16>, vector<16x128xf32> -> vector<16x128xf32>
    %22 = vector.broadcast %17 : vector<1x128xf32> to vector<16x128xf32>
    %23 = arith.addf %21, %22 : vector<16x128xf32>
    %cst_18 = arith.constant dense<0xFF800000> : vector<16xf32>
    %24 = vector.multi_reduction <maximumf>, %23, %cst_18 [1] : vector<16x128xf32> to vector<16xf32>
    %25 = vector.shape_cast %24 : vector<16xf32> to vector<16x1xf32>
    %26 = vector.broadcast %25 : vector<16x1xf32> to vector<16x128xf32>
    %27 = arith.subf %23, %26 : vector<16x128xf32>
    %28 = math.exp %27 : vector<16x128xf32>
    %cst_19 = arith.constant dense<0.000000e+00> : vector<16xf32>
    %29 = vector.multi_reduction <add>, %28, %cst_19 [1] : vector<16x128xf32> to vector<16xf32>
    %30 = vector.shape_cast %29 : vector<16xf32> to vector<16x1xf32>
    %31 = arith.truncf %28 : vector<16x128xf32> to vector<16x128xbf16>
    %cst_20 = arith.constant dense<0.000000e+00> : vector<16x128xf32>
    %32 = tpu.matmul %31, %20, %cst_20 {dimension_numbers = #tpu.dot_dimension_numbers<[1], [0], [0], [1], [0, 0, 1, 1], [], []>} : vector<16x128xbf16>, vector<128x128xbf16>, vector<16x128xf32> -> vector<16x128xf32>
    %33 = tpu.reciprocal %30 {approx = true} : vector<16x1xf32> -> vector<16x1xf32>
    %34 = vector.broadcast %33 : vector<16x1xf32> to vector<16x128xf32>
    %35 = arith.mulf %32, %34 : vector<16x128xf32>
    %36 = arith.truncf %35 : vector<16x128xf32> to vector<16x128xbf16>
    %c0_21 = arith.constant 0 : index
    %c0_22 = arith.constant 0 : index
    %37 = vector.load %arg16[%c0_21, %c0_22] : memref<16x512xbf16, #tpu.memory_space<vmem>>, vector<16x128xbf16>
    tpu.vector_store %arg16[%c0_21, %c0_22], %36 {strides = array<i32>} : memref<16x512xbf16, #tpu.memory_space<vmem>>, vector<16x128xbf16>,
    %c0_23 = arith.constant 0 : index
    %c128 = arith.constant 128 : index
    %38 = vector.load %arg15[%c0_23, %c128] : memref<16x512xbf16, #tpu.memory_space<vmem>>, vector<16x128xbf16>
    %c0_24 = arith.constant 0 : index
    %c128_25 = arith.constant 128 : index
    %39 = vector.load %arg13[%c0_24, %c128_25] : memref<128x512xbf16, #tpu.memory_space<vmem>>, vector<128x128xbf16>
    %c0_26 = arith.constant 0 : index
    %c128_27 = arith.constant 128 : index
    %40 = vector.load %arg14[%c0_26, %c128_27] : memref<128x512xbf16, #tpu.memory_space<vmem>>, vector<128x128xbf16>
    %cst_28 = arith.constant dense<0.000000e+00> : vector<16x128xf32>
    %41 = tpu.matmul %38, %39, %cst_28 {dimension_numbers = #tpu.dot_dimension_numbers<[1], [1], [0], [0], [0, 0, 1, 0], [], []>} : vector<16x128xbf16>, vector<128x128xbf16>, vector<16x128xf32> -> vector<16x128xf32>
    %42 = vector.broadcast %17 : vector<1x128xf32> to vector<16x128xf32>
    %43 = arith.addf %41, %42 : vector<16x128xf32>
    %cst_29 = arith.constant dense<0xFF800000> : vector<16xf32>
    %44 = vector.multi_reduction <maximumf>, %43, %cst_29 [1] : vector<16x128xf32> to vector<16xf32>
    %45 = vector.shape_cast %44 : vector<16xf32> to vector<16x1xf32>
    %46 = vector.broadcast %45 : vector<16x1xf32> to vector<16x128xf32>
    %47 = arith.subf %43, %46 : vector<16x128xf32>
    %48 = math.exp %47 : vector<16x128xf32>
    %cst_30 = arith.constant dense<0.000000e+00> : vector<16xf32>
    %49 = vector.multi_reduction <add>, %48, %cst_30 [1] : vector<16x128xf32> to vector<16xf32>
    %50 = vector.shape_cast %49 : vector<16xf32> to vector<16x1xf32>
    %51 = arith.truncf %48 : vector<16x128xf32> to vector<16x128xbf16>
    %cst_31 = arith.constant dense<0.000000e+00> : vector<16x128xf32>
    %52 = tpu.matmul %51, %40, %cst_31 {dimension_numbers = #tpu.dot_dimension_numbers<[1], [0], [0], [1], [0, 0, 1, 1], [], []>} : vector<16x128xbf16>, vector<128x128xbf16>, vector<16x128xf32> -> vector<16x128xf32>
    %53 = tpu.reciprocal %50 {approx = true} : vector<16x1xf32> -> vector<16x1xf32>
    %54 = vector.broadcast %53 : vector<16x1xf32> to vector<16x128xf32>
    %55 = arith.mulf %52, %54 : vector<16x128xf32>
    %56 = arith.truncf %55 : vector<16x128xf32> to vector<16x128xbf16>
    %c0_32 = arith.constant 0 : index
    %c128_33 = arith.constant 128 : index
    %57 = vector.load %arg16[%c0_32, %c128_33] : memref<16x512xbf16, #tpu.memory_space<vmem>>, vector<16x128xbf16>
    tpu.vector_store %arg16[%c0_32, %c128_33], %56 {strides = array<i32>} : memref<16x512xbf16, #tpu.memory_space<vmem>>, vector<16x128xbf16>,
    %c0_34 = arith.constant 0 : index
    %c256 = arith.constant 256 : index
    %58 = vector.load %arg15[%c0_34, %c256] : memref<16x512xbf16, #tpu.memory_space<vmem>>, vector<16x128xbf16>
    %c0_35 = arith.constant 0 : index
    %c256_36 = arith.constant 256 : index
    %59 = vector.load %arg13[%c0_35, %c256_36] : memref<128x512xbf16, #tpu.memory_space<vmem>>, vector<128x128xbf16>
    %c0_37 = arith.constant 0 : index
    %c256_38 = arith.constant 256 : index
    %60 = vector.load %arg14[%c0_37, %c256_38] : memref<128x512xbf16, #tpu.memory_space<vmem>>, vector<128x128xbf16>
    %cst_39 = arith.constant dense<0.000000e+00> : vector<16x128xf32>
    %61 = tpu.matmul %58, %59, %cst_39 {dimension_numbers = #tpu.dot_dimension_numbers<[1], [1], [0], [0], [0, 0, 1, 0], [], []>} : vector<16x128xbf16>, vector<128x128xbf16>, vector<16x128xf32> -> vector<16x128xf32>
    %62 = vector.broadcast %17 : vector<1x128xf32> to vector<16x128xf32>
    %63 = arith.addf %61, %62 : vector<16x128xf32>
    %cst_40 = arith.constant dense<0xFF800000> : vector<16xf32>
    %64 = vector.multi_reduction <maximumf>, %63, %cst_40 [1] : vector<16x128xf32> to vector<16xf32>
    %65 = vector.shape_cast %64 : vector<16xf32> to vector<16x1xf32>
    %66 = vector.broadcast %65 : vector<16x1xf32> to vector<16x128xf32>
    %67 = arith.subf %63, %66 : vector<16x128xf32>
    %68 = math.exp %67 : vector<16x128xf32>
    %cst_41 = arith.constant dense<0.000000e+00> : vector<16xf32>
    %69 = vector.multi_reduction <add>, %68, %cst_41 [1] : vector<16x128xf32> to vector<16xf32>
    %70 = vector.shape_cast %69 : vector<16xf32> to vector<16x1xf32>
    %71 = arith.truncf %68 : vector<16x128xf32> to vector<16x128xbf16>
    %cst_42 = arith.constant dense<0.000000e+00> : vector<16x128xf32>
    %72 = tpu.matmul %71, %60, %cst_42 {dimension_numbers = #tpu.dot_dimension_numbers<[1], [0], [0], [1], [0, 0, 1, 1], [], []>} : vector<16x128xbf16>, vector<128x128xbf16>, vector<16x128xf32> -> vector<16x128xf32>
    %73 = tpu.reciprocal %70 {approx = true} : vector<16x1xf32> -> vector<16x1xf32>
    %74 = vector.broadcast %73 : vector<16x1xf32> to vector<16x128xf32>
    %75 = arith.mulf %72, %74 : vector<16x128xf32>
    %76 = arith.truncf %75 : vector<16x128xf32> to vector<16x128xbf16>
    %c0_43 = arith.constant 0 : index
    %c256_44 = arith.constant 256 : index
    %77 = vector.load %arg16[%c0_43, %c256_44] : memref<16x512xbf16, #tpu.memory_space<vmem>>, vector<16x128xbf16>
    tpu.vector_store %arg16[%c0_43, %c256_44], %76 {strides = array<i32>} : memref<16x512xbf16, #tpu.memory_space<vmem>>, vector<16x128xbf16>,
    %c0_45 = arith.constant 0 : index
    %c384 = arith.constant 384 : index
    %78 = vector.load %arg15[%c0_45, %c384] : memref<16x512xbf16, #tpu.memory_space<vmem>>, vector<16x128xbf16>
    %c0_46 = arith.constant 0 : index
    %c384_47 = arith.constant 384 : index
    %79 = vector.load %arg13[%c0_46, %c384_47] : memref<128x512xbf16, #tpu.memory_space<vmem>>, vector<128x128xbf16>
    %c0_48 = arith.constant 0 : index
    %c384_49 = arith.constant 384 : index
    %80 = vector.load %arg14[%c0_48, %c384_49] : memref<128x512xbf16, #tpu.memory_space<vmem>>, vector<128x128xbf16>
    %cst_50 = arith.constant dense<0.000000e+00> : vector<16x128xf32>
    %81 = tpu.matmul %78, %79, %cst_50 {dimension_numbers = #tpu.dot_dimension_numbers<[1], [1], [0], [0], [0, 0, 1, 0], [], []>} : vector<16x128xbf16>, vector<128x128xbf16>, vector<16x128xf32> -> vector<16x128xf32>
    %82 = vector.broadcast %17 : vector<1x128xf32> to vector<16x128xf32>
    %83 = arith.addf %81, %82 : vector<16x128xf32>
    %cst_51 = arith.constant dense<0xFF800000> : vector<16xf32>
    %84 = vector.multi_reduction <maximumf>, %83, %cst_51 [1] : vector<16x128xf32> to vector<16xf32>
    %85 = vector.shape_cast %84 : vector<16xf32> to vector<16x1xf32>
    %86 = vector.broadcast %85 : vector<16x1xf32> to vector<16x128xf32>
    %87 = arith.subf %83, %86 : vector<16x128xf32>
    %88 = math.exp %87 : vector<16x128xf32>
    %cst_52 = arith.constant dense<0.000000e+00> : vector<16xf32>
    %89 = vector.multi_reduction <add>, %88, %cst_52 [1] : vector<16x128xf32> to vector<16xf32>
    %90 = vector.shape_cast %89 : vector<16xf32> to vector<16x1xf32>
    %91 = arith.truncf %88 : vector<16x128xf32> to vector<16x128xbf16>
    %cst_53 = arith.constant dense<0.000000e+00> : vector<16x128xf32>
    %92 = tpu.matmul %91, %80, %cst_53 {dimension_numbers = #tpu.dot_dimension_numbers<[1], [0], [0], [1], [0, 0, 1, 1], [], []>} : vector<16x128xbf16>, vector<128x128xbf16>, vector<16x128xf32> -> vector<16x128xf32>
    %93 = tpu.reciprocal %90 {approx = true} : vector<16x1xf32> -> vector<16x1xf32>
    %94 = vector.broadcast %93 : vector<16x1xf32> to vector<16x128xf32>
    %95 = arith.mulf %92, %94 : vector<16x128xf32>
    %96 = arith.truncf %95 : vector<16x128xf32> to vector<16x128xbf16>
    %c0_54 = arith.constant 0 : index
    %c384_55 = arith.constant 384 : index
    %97 = vector.load %arg16[%c0_54, %c384_55] : memref<16x512xbf16, #tpu.memory_space<vmem>>, vector<16x128xbf16>
    tpu.vector_store %arg16[%c0_54, %c384_55], %96 {strides = array<i32>} : memref<16x512xbf16, #tpu.memory_space<vmem>>, vector<16x128xbf16>,
    %c0_56 = arith.constant 0 : index
    %c0_57 = arith.constant 0 : index
    %98 = vector.load %arg16[%c0_56, %c0_57] : memref<16x512xbf16, #tpu.memory_space<vmem>>, vector<16x512xbf16>
    %c0_58 = arith.constant 0 : index
    %c0_59 = arith.constant 0 : index
    %99 = vector.load %arg10[%c0_58, %c0_59] : memref<512x32xbf16, #tpu.memory_space<vmem>>, vector<512x32xbf16>
    %cst_60 = arith.constant dense<0.000000e+00> : vector<16x32xf32>
    %100 = tpu.matmul %98, %99, %cst_60 {dimension_numbers = #tpu.dot_dimension_numbers<[1], [0], [0], [1], [0, 0, 1, 1], [], []>} : vector<16x512xbf16>, vector<512x32xbf16>, vector<16x32xf32> -> vector<16x32xf32>
    %c0_61 = arith.constant 0 : index
    %c0_62 = arith.constant 0 : index
    %101 = vector.load %arg11[%c0_61, %c0_62] : memref<1x32xf32, #tpu.memory_space<vmem>>, vector<1x32xf32>
    %102 = vector.broadcast %101 : vector<1x32xf32> to vector<16x32xf32>
    %103 = arith.addf %100, %102 : vector<16x32xf32>
    %c0_63 = arith.constant 0 : index
    %c0_64 = arith.constant 0 : index
    %c0_65 = arith.constant 0 : index
    %104 = vector.load %arg12[%c0_63, %c0_64, %c0_65] : memref<1x16x32xf32, #tpu.memory_space<vmem>>, vector<1x16x32xf32>
    %105 = vector.shape_cast %104 : vector<1x16x32xf32> to vector<16x32xf32>
    %106 = vector.shape_cast %103 : vector<16x32xf32> to vector<1x16x32xf32>
    tpu.vector_store %arg12[%c0_63, %c0_64, %c0_65], %106 {strides = array<i32>} : memref<1x16x32xf32, #tpu.memory_space<vmem>>, vector<1x16x32xf32>,
    return
  }
  func.func @transform_0(%arg0: i32, %arg1: i32) -> (i32, i32, i32) {
    %c0_i32 = arith.constant 0 : i32
    %c0_i32_0 = arith.constant 0 : i32
    return %arg0, %arg1, %c0_i32 : i32, i32, i32
  }
  func.func @transform_1(%arg0: i32, %arg1: i32) -> (i32, i32, i32) {
    %c0_i32 = arith.constant 0 : i32
    %c0_i32_0 = arith.constant 0 : i32
    %c0_i32_1 = arith.constant 0 : i32
    return %arg0, %c0_i32, %c0_i32_0 : i32, i32, i32
  }
  func.func @transform_2(%arg0: i32, %arg1: i32) -> (i32, i32) {
    %c0_i32 = arith.constant 0 : i32
    %c0_i32_0 = arith.constant 0 : i32
    %c0_i32_1 = arith.constant 0 : i32
    return %c0_i32, %c0_i32_0 : i32, i32
  }
  func.func @transform_3(%arg0: i32, %arg1: i32) -> (i32, i32) {
    %c0_i32 = arith.constant 0 : i32
    %c0_i32_0 = arith.constant 0 : i32
    %c0_i32_1 = arith.constant 0 : i32
    return %c0_i32, %c0_i32_0 : i32, i32
  }
  func.func @transform_4(%arg0: i32, %arg1: i32) -> (i32, i32) {
    %c0_i32 = arith.constant 0 : i32
    %c0_i32_0 = arith.constant 0 : i32
    %c0_i32_1 = arith.constant 0 : i32
    return %c0_i32, %c0_i32_0 : i32, i32
  }
  func.func @transform_5(%arg0: i32, %arg1: i32) -> (i32, i32) {
    %c0_i32 = arith.constant 0 : i32
    %c0_i32_0 = arith.constant 0 : i32
    %c0_i32_1 = arith.constant 0 : i32
    return %c0_i32, %c0_i32_0 : i32, i32
  }
  func.func @transform_6(%arg0: i32, %arg1: i32) -> (i32, i32) {
    %c0_i32 = arith.constant 0 : i32
    %c0_i32_0 = arith.constant 0 : i32
    %c0_i32_1 = arith.constant 0 : i32
    return %c0_i32, %c0_i32_0 : i32, i32
  }
  func.func @transform_7(%arg0: i32, %arg1: i32) -> (i32, i32) {
    %c0_i32 = arith.constant 0 : i32
    %c0_i32_0 = arith.constant 0 : i32
    %c0_i32_1 = arith.constant 0 : i32
    return %c0_i32, %c0_i32_0 : i32, i32
  }
  func.func @transform_8(%arg0: i32, %arg1: i32) -> (i32, i32) {
    %c0_i32 = arith.constant 0 : i32
    %c0_i32_0 = arith.constant 0 : i32
    %c0_i32_1 = arith.constant 0 : i32
    return %c0_i32, %c0_i32_0 : i32, i32
  }
  func.func @transform_9(%arg0: i32, %arg1: i32) -> (i32, i32) {
    %c0_i32 = arith.constant 0 : i32
    %c0_i32_0 = arith.constant 0 : i32
    %c0_i32_1 = arith.constant 0 : i32
    return %c0_i32, %c0_i32_0 : i32, i32
  }
  func.func @transform_10(%arg0: i32, %arg1: i32) -> (i32, i32, i32) {
    %c0_i32 = arith.constant 0 : i32
    %c0_i32_0 = arith.constant 0 : i32
    return %arg0, %arg1, %c0_i32 : i32, i32, i32
  }
}

</mosaic_0001>

<llo_original>
// kernel: tpu_custom_call.1
$region0: #{tpu_custom_call.1}
  #allocation0 [shape = 'u32[]', space=smem, size = 0x4, offset = 0x4, fixed_abs, tag = 'smem constant byte address 0x4 - core index']
  #allocation1 [shape = 'u32[144,128]{1,0:T(1,128)}', space=vmem, size = 0x12000, scoped, tag = 'internal scratch']
  #allocation2 [shape = 'bf16[128,512]{1,0:T(16,128)(2,1)}', space=vmem, size = 0x20000, scoped, tag = 'scratch operand']
  #allocation3 [shape = 'bf16[128,512]{1,0:T(16,128)(2,1)}', space=vmem, size = 0x20000, scoped, tag = 'scratch operand']
  #allocation4 [shape = 'bf16[16,512]{1,0:T(16,128)(2,1)}', space=vmem, size = 0x4000, scoped, tag = 'scratch operand']
  #allocation5 [shape = 'bf16[16,512]{1,0:T(16,128)(2,1)}', space=vmem, size = 0x4000, scoped, tag = 'scratch operand']
  %s0 = inlined_call_operand.hbm [shape: bf16[2,16,32], index: 0, kind: input, shape index: {}]
  %s1 = inlined_call_operand.hbm [shape: bf16[2,128,24], index: 1, kind: input, shape index: {}]
  %s2 = inlined_call_operand.hbm [shape: bf16[32,512], index: 2, kind: input, shape index: {}]
  %s3 = inlined_call_operand.hbm [shape: f32[1,512], index: 3, kind: input, shape index: {}]
  %s4 = inlined_call_operand.hbm [shape: bf16[24,512], index: 4, kind: input, shape index: {}]
  %s5 = inlined_call_operand.hbm [shape: f32[1,512], index: 5, kind: input, shape index: {}]
  %s6 = inlined_call_operand.hbm [shape: bf16[24,512], index: 6, kind: input, shape index: {}]
  %s7 = inlined_call_operand.hbm [shape: f32[1,512], index: 7, kind: input, shape index: {}]
  %s8 = inlined_call_operand.hbm [shape: bf16[512,32], index: 8, kind: input, shape index: {}]
  %s9 = inlined_call_operand.hbm [shape: f32[1,32], index: 9, kind: input, shape index: {}]
  %s10 = inlined_call_operand.hbm [shape: f32[2,16,32], index: 10, kind: output, shape index: {}]
  %s11 = sld [smem:[#allocation0]]
  $region117: #{tpu_custom_call.1} parent=0
    _
  %s13 = ssub.s32 1, %s11
  %s14 = scalar_select 0, %s13, %s11
  $region1: #{tpu_custom_call.1} parent=0
    #allocation6 [shape = 'u8[8192]{0}', space=vmem, size = 0x2000, scoped, tag = 'input window, operand 0']
    #allocation7 [shape = 's32[2]{0}', space=sflag, size = 0x8, scoped, tag = 'scoped memory for tpu_custom_call.1']
    #allocation8 [shape = 's32[2]{0}', space=sflag, size = 0x8, scoped, tag = 'scoped memory for tpu_custom_call.1']
    #allocation9 [shape = 'u8[65536]{0}', space=vmem, size = 0x10000, scoped, tag = 'input window, operand 1']
    #allocation10 [shape = 's32[2]{0}', space=sflag, size = 0x8, scoped, tag = 'scoped memory for tpu_custom_call.1']
    #allocation11 [shape = 'u8[32768]{0}', space=vmem, size = 0x8000, scoped, tag = 'input window, operand 2, single buffered']
    #allocation12 [shape = 'u8[2048]{0}', space=vmem, size = 0x800, scoped, tag = 'input window, operand 3, single buffered']
    #allocation13 [shape = 's32[1]{0}', space=sflag, size = 0x4, scoped, tag = 'scoped memory for tpu_custom_call.1']
    #allocation14 [shape = 'u8[24576]{0}', space=vmem, size = 0x6000, scoped, tag = 'input window, operand 4, single buffered']
    #allocation15 [shape = 'u8[2048]{0}', space=vmem, size = 0x800, scoped, tag = 'input window, operand 5, single buffered']
    #allocation16 [shape = 's32[1]{0}', space=sflag, size = 0x4, scoped, tag = 'scoped memory for tpu_custom_call.1']
    #allocation17 [shape = 'u8[24576]{0}', space=vmem, size = 0x6000, scoped, tag = 'input window, operand 6, single buffered']
    #allocation18 [shape = 'u8[2048]{0}', space=vmem, size = 0x800, scoped, tag = 'input window, operand 7, single buffered']
    #allocation19 [shape = 's32[1]{0}', space=sflag, size = 0x4, scoped, tag = 'scoped memory for tpu_custom_call.1']
    #allocation20 [shape = 'u8[131072]{0}', space=vmem, size = 0x20000, scoped, tag = 'input window, operand 8, single buffered']
    #allocation21 [shape = 'u8[512]{0}', space=vmem, size = 0x400, scoped, tag = 'input window, operand 9, single buffered']
    #allocation22 [shape = 's32[1]{0}', space=sflag, size = 0x4, scoped, tag = 'scoped memory for tpu_custom_call.1']
    #allocation23 [shape = 'u8[16384]{0}', space=vmem, size = 0x4000, scoped, tag = 'output window, operand 0']
    %15 = vsyncpa [#allocation7], 0
    %s16 = scalar_lea.sflag [#allocation7], 1
    %17 = vsyncpa %s16, 0
    %18 = vsyncpa [#allocation10], 0
    %s19 = scalar_lea.sflag [#allocation10], 1
    %20 = vsyncpa %s19, 0
    %21 = vsyncpa [#allocation13], 0
    %22 = vsyncpa [#allocation16], 0
    %23 = vsyncpa [#allocation19], 0
    %24 = vsyncpa [#allocation22], 0
    %25 = vsyncpa [#allocation8], 0
    %s26 = scalar_lea.sflag [#allocation8], 1
    %27 = vsyncpa %s26, 0
    loop: start=0, step=1, limit=4
    $region2: #{tpu_custom_call.1} parent=1 // loop_pre_header
      _
    $region3: #{tpu_custom_call.1} parent=1 // loop_header
      %s29 = sphi 0, %s33
      %p30 = scmp.ge.s32.totalorder %s29, 4
      %s36 = sphi 0, %s48
      %s37 = sphi 0, %s44
      %s38 = sphi 0, %s36
      %s39 = sphi 0, %s37
      %s40 = sphi 0, %s38
      %s41 = sphi 0, %s39
      %s53 = sphi 0, %s55
      %s56 = sphi 0, %s53
      %s57 = sphi 0, %s56
      %s73 = sphi 0, %s57
      %s79 = sphi 0, %s81
      %s82 = sphi 0, %s79
      %s83 = sphi 0, %s82
      %s99 = sphi 0, %s83
      %s103 = sphi 0, %s103
      %s105 = sphi 0, %s103
      %s106 = sphi 0, %s105
      %s120 = sphi 0, %s106
      %s124 = sphi 0, %s124
      %s126 = sphi 0, %s124
      %s127 = sphi 0, %s126
      %s141 = sphi 0, %s127
      %s145 = sphi 0, %s145
      %s147 = sphi 0, %s145
      %s148 = sphi 0, %s147
      %s162 = sphi 0, %s148
      %s166 = sphi 0, %s166
      %s168 = sphi 0, %s166
      %s169 = sphi 0, %s168
      %s183 = sphi 0, %s169
      %s187 = sphi 0, %s187
      %s189 = sphi 0, %s187
      %s190 = sphi 0, %s189
      %s204 = sphi 0, %s190
      %s208 = sphi 0, %s208
      %s210 = sphi 0, %s208
      %s211 = sphi 0, %s210
      %s225 = sphi 0, %s211
      %s229 = sphi 0, %s229
      %s231 = sphi 0, %s229
      %s232 = sphi 0, %s231
      %s246 = sphi 0, %s232
      %s250 = sphi 0, %s250
      %s252 = sphi 0, %s250
      %s253 = sphi 0, %s252
      %s267 = sphi 0, %s253
      %s275 = sphi 0, %s277
      %s278 = sphi 0, %s275
      %s279 = sphi 0, %s278
      %s295 = sphi 0, %s279
    $region4: #{tpu_custom_call.1} parent=1 // loop_header_branch
      %32 = sbr.rel (%p30) target = $region8
    $region5: #{tpu_custom_call.1} parent=1 // loop_body
      %s34 = ssub.s32 %s29, 1
      %s35 = ssub.s32 %s29, 2
      %s42 = sadd.s32 1, %s37
      %p43 = scmp.ge.s32.totalorder %s42, 1
      %s44 = scalar_select %p43, 0, %s42
      %s45 = sadd.s32 1, %s36
      %s46 = scalar_select %p43, %s45, %s36
      %p47 = scmp.ge.s32.totalorder %s46, 2
      %s48 = scalar_select %p47, 0, %s46
      %s49 = ssub.s32 %s36, %s48
      %s50 = ssub.s32 %s37, %s44
      %s51 = sor.u32 %s49, %s50
      %p52 = scmp.eq.s32.totalorder %s51, 0
      %s54 = sadd.s32 %s53, 1
      %s55 = scalar_select %p52, %s53, %s54
      %p58 = pneg %p52
      %p59 = scmp.eq.s32.totalorder %s29, 1
      %p60 = por %p58, %p59
      %p61 = scmp.ne.s32.totalorder %s53, %s56
      %p62 = scmp.eq.s32.totalorder %s29, 0
      %p63 = por %p61, %p62
      %p64 = scmp.ne.s32.totalorder %s53, %s56
      %p65 = scmp.eq.s32.totalorder %s34, 1
      %p66 = por %p64, %p65
      %p67 = scmp.ne.s32.totalorder %s56, %s57
      %p68 = scmp.eq.s32.totalorder %s34, 0
      %p69 = por %p67, %p68
      %p70 = scmp.ne.s32.totalorder %s56, %s57
      %p71 = scmp.eq.s32.totalorder %s35, 1
      %p72 = por %p70, %p71
      %p74 = scmp.ne.s32.totalorder %s57, %s73
      %p75 = scmp.eq.s32.totalorder %s35, 0
      %p76 = por %p74, %p75
      %s77 = ssub.s32 %s36, %s48
      %p78 = scmp.eq.s32.totalorder %s77, 0
      %s80 = sadd.s32 %s79, 1
      %s81 = scalar_select %p78, %s79, %s80
      %p84 = pneg %p78
      %p85 = scmp.eq.s32.totalorder %s29, 1
      %p86 = por %p84, %p85
      %p87 = scmp.ne.s32.totalorder %s79, %s82
      %p88 = scmp.eq.s32.totalorder %s29, 0
      %p89 = por %p87, %p88
      %p90 = scmp.ne.s32.totalorder %s79, %s82
      %p91 = scmp.eq.s32.totalorder %s34, 1
      %p92 = por %p90, %p91
      %p93 = scmp.ne.s32.totalorder %s82, %s83
      %p94 = scmp.eq.s32.totalorder %s34, 0
      %p95 = por %p93, %p94
      %p96 = scmp.ne.s32.totalorder %s82, %s83
      %p97 = scmp.eq.s32.totalorder %s35, 1
      %p98 = por %p96, %p97
      %p100 = scmp.ne.s32.totalorder %s83, %s99
      %p101 = scmp.eq.s32.totalorder %s35, 0
      %p102 = por %p100, %p101
      %s104 = sadd.s32 %s103, 1
      %p107 = scmp.eq.s32.totalorder %s29, 1
      %p108 = scmp.ne.s32.totalorder %s103, %s105
      %p109 = scmp.eq.s32.totalorder %s29, 0
      %p110 = por %p108, %p109
      %p111 = scmp.ne.s32.totalorder %s103, %s105
      %p112 = scmp.eq.s32.totalorder %s34, 1
      %p113 = por %p111, %p112
      %p114 = scmp.ne.s32.totalorder %s105, %s106
      %p115 = scmp.eq.s32.totalorder %s34, 0
      %p116 = por %p114, %p115
      %p117 = scmp.ne.s32.totalorder %s105, %s106
      %p118 = scmp.eq.s32.totalorder %s35, 1
      %p119 = por %p117, %p118
      %p121 = scmp.ne.s32.totalorder %s106, %s120
      %p122 = scmp.eq.s32.totalorder %s35, 0
      %p123 = por %p121, %p122
      %s125 = sadd.s32 %s124, 1
      %p128 = scmp.eq.s32.totalorder %s29, 1
      %p129 = scmp.ne.s32.totalorder %s124, %s126
      %p130 = scmp.eq.s32.totalorder %s29, 0
      %p131 = por %p129, %p130
      %p132 = scmp.ne.s32.totalorder %s124, %s126
      %p133 = scmp.eq.s32.totalorder %s34, 1
      %p134 = por %p132, %p133
      %p135 = scmp.ne.s32.totalorder %s126, %s127
      %p136 = scmp.eq.s32.totalorder %s34, 0
      %p137 = por %p135, %p136
      %p138 = scmp.ne.s32.totalorder %s126, %s127
      %p139 = scmp.eq.s32.totalorder %s35, 1
      %p140 = por %p138, %p139
      %p142 = scmp.ne.s32.totalorder %s127, %s141
      %p143 = scmp.eq.s32.totalorder %s35, 0
      %p144 = por %p142, %p143
      %s146 = sadd.s32 %s145, 1
      %p149 = scmp.eq.s32.totalorder %s29, 1
      %p150 = scmp.ne.s32.totalorder %s145, %s147
      %p151 = scmp.eq.s32.totalorder %s29, 0
      %p152 = por %p150, %p151
      %p153 = scmp.ne.s32.totalorder %s145, %s147
      %p154 = scmp.eq.s32.totalorder %s34, 1
      %p155 = por %p153, %p154
      %p156 = scmp.ne.s32.totalorder %s147, %s148
      %p157 = scmp.eq.s32.totalorder %s34, 0
      %p158 = por %p156, %p157
      %p159 = scmp.ne.s32.totalorder %s147, %s148
      %p160 = scmp.eq.s32.totalorder %s35, 1
      %p161 = por %p159, %p160
      %p163 = scmp.ne.s32.totalorder %s148, %s162
      %p164 = scmp.eq.s32.totalorder %s35, 0
      %p165 = por %p163, %p164
      %s167 = sadd.s32 %s166, 1
      %p170 = scmp.eq.s32.totalorder %s29, 1
      %p171 = scmp.ne.s32.totalorder %s166, %s168
      %p172 = scmp.eq.s32.totalorder %s29, 0
      %p173 = por %p171, %p172
      %p174 = scmp.ne.s32.totalorder %s166, %s168
      %p175 = scmp.eq.s32.totalorder %s34, 1
      %p176 = por %p174, %p175
      %p177 = scmp.ne.s32.totalorder %s168, %s169
      %p178 = scmp.eq.s32.totalorder %s34, 0
      %p179 = por %p177, %p178
      %p180 = scmp.ne.s32.totalorder %s168, %s169
      %p181 = scmp.eq.s32.totalorder %s35, 1
      %p182 = por %p180, %p181
      %p184 = scmp.ne.s32.totalorder %s169, %s183
      %p185 = scmp.eq.s32.totalorder %s35, 0
      %p186 = por %p184, %p185
      %s188 = sadd.s32 %s187, 1
      %p191 = scmp.eq.s32.totalorder %s29, 1
      %p192 = scmp.ne.s32.totalorder %s187, %s189
      %p193 = scmp.eq.s32.totalorder %s29, 0
      %p194 = por %p192, %p193
      %p195 = scmp.ne.s32.totalorder %s187, %s189
      %p196 = scmp.eq.s32.totalorder %s34, 1
      %p197 = por %p195, %p196
      %p198 = scmp.ne.s32.totalorder %s189, %s190
      %p199 = scmp.eq.s32.totalorder %s34, 0
      %p200 = por %p198, %p199
      %p201 = scmp.ne.s32.totalorder %s189, %s190
      %p202 = scmp.eq.s32.totalorder %s35, 1
      %p203 = por %p201, %p202
      %p205 = scmp.ne.s32.totalorder %s190, %s204
      %p206 = scmp.eq.s32.totalorder %s35, 0
      %p207 = por %p205, %p206
      %s209 = sadd.s32 %s208, 1
      %p212 = scmp.eq.s32.totalorder %s29, 1
      %p213 = scmp.ne.s32.totalorder %s208, %s210
      %p214 = scmp.eq.s32.totalorder %s29, 0
      %p215 = por %p213, %p214
      %p216 = scmp.ne.s32.totalorder %s208, %s210
      %p217 = scmp.eq.s32.totalorder %s34, 1
      %p218 = por %p216, %p217
      %p219 = scmp.ne.s32.totalorder %s210, %s211
      %p220 = scmp.eq.s32.totalorder %s34, 0
      %p221 = por %p219, %p220
      %p222 = scmp.ne.s32.totalorder %s210, %s211
      %p223 = scmp.eq.s32.totalorder %s35, 1
      %p224 = por %p222, %p223
      %p226 = scmp.ne.s32.totalorder %s211, %s225
      %p227 = scmp.eq.s32.totalorder %s35, 0
      %p228 = por %p226, %p227
      %s230 = sadd.s32 %s229, 1
      %p233 = scmp.eq.s32.totalorder %s29, 1
      %p234 = scmp.ne.s32.totalorder %s229, %s231
      %p235 = scmp.eq.s32.totalorder %s29, 0
      %p236 = por %p234, %p235
      %p237 = scmp.ne.s32.totalorder %s229, %s231
      %p238 = scmp.eq.s32.totalorder %s34, 1
      %p239 = por %p237, %p238
      %p240 = scmp.ne.s32.totalorder %s231, %s232
      %p241 = scmp.eq.s32.totalorder %s34, 0
      %p242 = por %p240, %p241
      %p243 = scmp.ne.s32.totalorder %s231, %s232
      %p244 = scmp.eq.s32.totalorder %s35, 1
      %p245 = por %p243, %p244
      %p247 = scmp.ne.s32.totalorder %s232, %s246
      %p248 = scmp.eq.s32.totalorder %s35, 0
      %p249 = por %p247, %p248
      %s251 = sadd.s32 %s250, 1
      %p254 = scmp.eq.s32.totalorder %s29, 1
      %p255 = scmp.ne.s32.totalorder %s250, %s252
      %p256 = scmp.eq.s32.totalorder %s29, 0
      %p257 = por %p255, %p256
      %p258 = scmp.ne.s32.totalorder %s250, %s252
      %p259 = scmp.eq.s32.totalorder %s34, 1
      %p260 = por %p258, %p259
      %p261 = scmp.ne.s32.totalorder %s252, %s253
      %p262 = scmp.eq.s32.totalorder %s34, 0
      %p263 = por %p261, %p262
      %p264 = scmp.ne.s32.totalorder %s252, %s253
      %p265 = scmp.eq.s32.totalorder %s35, 1
      %p266 = por %p264, %p265
      %p268 = scmp.ne.s32.totalorder %s253, %s267
      %p269 = scmp.eq.s32.totalorder %s35, 0
      %p270 = por %p268, %p269
      %s271 = ssub.s32 %s36, %s48
      %s272 = ssub.s32 %s37, %s44
      %s273 = sor.u32 %s271, %s272
      %p274 = scmp.eq.s32.totalorder %s273, 0
      %s276 = sadd.s32 %s275, 1
      %s277 = scalar_select %p274, %s275, %s276
      %p280 = pneg %p274
      %p281 = scmp.eq.s32.totalorder %s29, 1
      %p282 = por %p280, %p281
      %p283 = scmp.ne.s32.totalorder %s275, %s278
      %p284 = scmp.eq.s32.totalorder %s29, 0
      %p285 = por %p283, %p284
      %p286 = scmp.ne.s32.totalorder %s275, %s278
      %p287 = scmp.eq.s32.totalorder %s34, 1
      %p288 = por %p286, %p287
      %p289 = scmp.ne.s32.totalorder %s278, %s279
      %p290 = scmp.eq.s32.totalorder %s34, 0
      %p291 = por %p289, %p290
      %p292 = scmp.ne.s32.totalorder %s278, %s279
      %p293 = scmp.eq.s32.totalorder %s35, 1
      %p294 = por %p292, %p293
      %p296 = scmp.ne.s32.totalorder %s279, %s295
      %p297 = scmp.eq.s32.totalorder %s35, 0
      %p298 = por %p296, %p297
      %p299 = scmp.le.s32.totalorder 1, %s29
      %p300 = scmp.lt.s32.totalorder %s29, 3
      %p301 = pnand %p299, %p300
      %p302 = pneg %p301
      // Predicated region
      $region9: #{tpu_custom_call.1} parent=5 // pred_check
        _
      $region10: #{tpu_custom_call.1} parent=5 // pred_check_branch
        %304 = sbr.rel (%p301) target = $region12
      $region11: #{tpu_custom_call.1} parent=5 // pred_region
        %s305 = ssub.s32 %s29, 1
        // Predicated region
        $region13: #{tpu_custom_call.1} parent=11 // pred_check
          %p306 = pneg %p116
        $region14: #{tpu_custom_call.1} parent=11 // pred_check_branch
          %308 = sbr.rel (%p306) target = $region16
        $region15: #{tpu_custom_call.1} parent=11 // pred_region
          %s310 = ssub.s32 1024, 1024
          %311 = vsyncadd [#allocation10], %s310
          %s312 = sshll.u32 [#allocation11], 4
          %s313 = int_to_ptr.vmem [resolvable:$true] %s312
          %318 = dma.hbm_to_vmem [thread:$0]  %s2, 1024, %s313, [#allocation10], 256, 256, 16
        $region16: #{tpu_custom_call.1} parent=11 // pred_fallthru
          _
        // Predicated region
        $region17: #{tpu_custom_call.1} parent=11 // pred_check
          %p319 = pneg %p137
        $region18: #{tpu_custom_call.1} parent=11 // pred_check_branch
          %321 = sbr.rel (%p319) target = $region20
        $region19: #{tpu_custom_call.1} parent=11 // pred_region
          %s323 = ssub.s32 64, 64
          %324 = vsyncadd [#allocation13], %s323
          %s326 = sshll.u32 [#allocation12], 4
          %s327 = int_to_ptr.vmem [resolvable:$true] %s326
          %329 = dma.hbm_to_vmem [thread:$0]  %s3, 64, %s327, [#allocation13]
        $region20: #{tpu_custom_call.1} parent=11 // pred_fallthru
          _
        // Predicated region
        $region21: #{tpu_custom_call.1} parent=11 // pred_check
          %p330 = pneg %p158
        $region22: #{tpu_custom_call.1} parent=11 // pred_check_branch
          %332 = sbr.rel (%p330) target = $region24
        $region23: #{tpu_custom_call.1} parent=11 // pred_region
          %s334 = ssub.s32 768, 768
          %335 = vsyncadd [#allocation13], %s334
          %s336 = sshll.u32 [#allocation14], 4
          %s337 = int_to_ptr.vmem [resolvable:$true] %s336
          %342 = dma.hbm_to_vmem [thread:$0]  %s4, 768, %s337, [#allocation13], 256, 256, 16
        $region24: #{tpu_custom_call.1} parent=11 // pred_fallthru
          _
        // Predicated region
        $region25: #{tpu_custom_call.1} parent=11 // pred_check
          %p343 = pneg %p179
        $region26: #{tpu_custom_call.1} parent=11 // pred_check_branch
          %345 = sbr.rel (%p343) target = $region28
        $region27: #{tpu_custom_call.1} parent=11 // pred_region
          %s347 = ssub.s32 64, 64
          %348 = vsyncadd [#allocation16], %s347
          %s350 = sshll.u32 [#allocation15], 4
          %s351 = int_to_ptr.vmem [resolvable:$true] %s350
          %353 = dma.hbm_to_vmem [thread:$0]  %s5, 64, %s351, [#allocation16]
        $region28: #{tpu_custom_call.1} parent=11 // pred_fallthru
          _
        // Predicated region
        $region29: #{tpu_custom_call.1} parent=11 // pred_check
          %p354 = pneg %p200
        $region30: #{tpu_custom_call.1} parent=11 // pred_check_branch
          %356 = sbr.rel (%p354) target = $region32
        $region31: #{tpu_custom_call.1} parent=11 // pred_region
          %s358 = ssub.s32 768, 768
          %359 = vsyncadd [#allocation16], %s358
          %s360 = sshll.u32 [#allocation17], 4
          %s361 = int_to_ptr.vmem [resolvable:$true] %s360
          %366 = dma.hbm_to_vmem [thread:$0]  %s6, 768, %s361, [#allocation16], 256, 256, 16
        $region32: #{tpu_custom_call.1} parent=11 // pred_fallthru
          _
        // Predicated region
        $region33: #{tpu_custom_call.1} parent=11 // pred_check
          %p367 = pneg %p221
        $region34: #{tpu_custom_call.1} parent=11 // pred_check_branch
          %369 = sbr.rel (%p367) target = $region36
        $region35: #{tpu_custom_call.1} parent=11 // pred_region
          %s371 = ssub.s32 64, 64
          %372 = vsyncadd [#allocation19], %s371
          %s374 = sshll.u32 [#allocation18], 4
          %s375 = int_to_ptr.vmem [resolvable:$true] %s374
          %377 = dma.hbm_to_vmem [thread:$0]  %s7, 64, %s375, [#allocation19]
        $region36: #{tpu_custom_call.1} parent=11 // pred_fallthru
          _
        // Predicated region
        $region37: #{tpu_custom_call.1} parent=11 // pred_check
          %p378 = pneg %p242
        $region38: #{tpu_custom_call.1} parent=11 // pred_check_branch
          %380 = sbr.rel (%p378) target = $region40
        $region39: #{tpu_custom_call.1} parent=11 // pred_region
          %s382 = ssub.s32 4096, 4096
          %383 = vsyncadd [#allocation19], %s382
          %s384 = sshll.u32 [#allocation20], 4
          %s385 = int_to_ptr.vmem [resolvable:$true] %s384
          %390 = dma.hbm_to_vmem [thread:$0]  %s8, 4096, %s385, [#allocation19], 64, 64, 4
        $region40: #{tpu_custom_call.1} parent=11 // pred_fallthru
          _
        // Predicated region
        $region41: #{tpu_custom_call.1} parent=11 // pred_check
          %p391 = pneg %p263
        $region42: #{tpu_custom_call.1} parent=11 // pred_check_branch
          %393 = sbr.rel (%p391) target = $region44
        $region43: #{tpu_custom_call.1} parent=11 // pred_region
          %s395 = ssub.s32 16, 16
          %396 = vsyncadd [#allocation22], %s395
          %s398 = sshll.u32 [#allocation21], 4
          %s399 = int_to_ptr.vmem [resolvable:$true] %s398
          %401 = dma.hbm_to_vmem [thread:$0]  %s9, 16, %s399, [#allocation22]
        $region44: #{tpu_custom_call.1} parent=11 // pred_fallthru
          _
      $region12: #{tpu_custom_call.1} parent=5 // pred_fallthru
        _
      %p402 = scmp.lt.s32.totalorder %s29, 2
      // Predicated region
      $region45: #{tpu_custom_call.1} parent=5 // pred_check
        %p403 = pneg %p402
      $region46: #{tpu_custom_call.1} parent=5 // pred_check_branch
        %405 = sbr.rel (%p403) target = $region48
      $region47: #{tpu_custom_call.1} parent=5 // pred_region
        // Predicated region
        $region49: #{tpu_custom_call.1} parent=47 // pred_check
          %p406 = pneg %p63
        $region50: #{tpu_custom_call.1} parent=47 // pred_check_branch
          %408 = sbr.rel (%p406) target = $region52
        $region51: #{tpu_custom_call.1} parent=47 // pred_region
          %s409 = sand.u32 %s53, 1
          %s410 = scalar_lea.sflag [#allocation7], %s409
          %s411 = sand.u32 %s53, 1
          %s412 = smul.addr %s411, 8
          %s413 = scalar_lea.vmem [#allocation6], %s412
          %s414 = smul.u32 2, %s37
          %s416 = ssub.s32 128, 128
          %417 = vsyncadd %s410, %s416
          %s418 = smul.addr %s36, 2
          %s419 = sadd.s32 %s414, %s418
          %s420 = smul.addr %s419, 64
          %s421 = scalar_lea.hbm %s0, %s420
          %s422 = sshll.u32 %s413, 4
          %s423 = int_to_ptr.vmem [resolvable:$true] %s422
          %428 = dma.hbm_to_vmem [thread:$0]  %s421, 128, %s423, %s410, 64, 64, 4
        $region52: #{tpu_custom_call.1} parent=47 // pred_fallthru
          _
        // Predicated region
        $region53: #{tpu_custom_call.1} parent=47 // pred_check
          %p429 = pneg %p89
        $region54: #{tpu_custom_call.1} parent=47 // pred_check_branch
          %431 = sbr.rel (%p429) target = $region56
        $region55: #{tpu_custom_call.1} parent=47 // pred_region
          %s432 = sand.u32 %s29, 1
          %s433 = scalar_lea.sflag [#allocation10], %s432
          %s434 = sand.u32 %s79, 1
          %s435 = smul.addr %s434, 64
          %s436 = scalar_lea.vmem [#allocation9], %s435
          %s438 = ssub.s32 1024, 1024
          %439 = vsyncadd %s433, %s438
          %s440 = smul.addr %s36, 16
          %s441 = smul.addr %s440, 64
          %s442 = scalar_lea.hbm %s1, %s441
          %s443 = sshll.u32 %s436, 4
          %s444 = int_to_ptr.vmem [resolvable:$true] %s443
          %449 = dma.hbm_to_vmem [thread:$0]  %s442, 1024, %s444, %s433, 64, 64, 4
        $region56: #{tpu_custom_call.1} parent=47 // pred_fallthru
          _
      $region48: #{tpu_custom_call.1} parent=5 // pred_fallthru
        _
      %p450 = scmp.le.s32.totalorder 1, %s29
      %p451 = scmp.lt.s32.totalorder %s29, 3
      %p452 = pnand %p450, %p451
      %p453 = pneg %p452
      // Predicated region
      $region57: #{tpu_custom_call.1} parent=5 // pred_check
        _
      $region58: #{tpu_custom_call.1} parent=5 // pred_check_branch
        %455 = sbr.rel (%p452) target = $region60
      $region59: #{tpu_custom_call.1} parent=5 // pred_region
        %s456 = ssub.s32 %s29, 1
        %s457 = sand.u32 %s56, 1
        %s458 = scalar_lea.sflag [#allocation7], %s457
        %s459 = sand.u32 %s56, 1
        %s460 = smul.addr %s459, 8
        %s461 = scalar_lea.vmem [#allocation6], %s460
        // Predicated region
        $region61: #{tpu_custom_call.1} parent=59 // pred_check
          %p462 = pneg %p69
        $region62: #{tpu_custom_call.1} parent=59 // pred_check_branch
          %464 = sbr.rel (%p462) target = $region64
        $region63: #{tpu_custom_call.1} parent=59 // pred_region
          %465 = dma.done %s458, 128
        $region64: #{tpu_custom_call.1} parent=59 // pred_fallthru
          _
        %s466 = sand.u32 %s34, 1
        %s467 = scalar_lea.sflag [#allocation10], %s466
        %s468 = sand.u32 %s82, 1
        %s469 = smul.addr %s468, 64
        %s470 = scalar_lea.vmem [#allocation9], %s469
        // Predicated region
        $region65: #{tpu_custom_call.1} parent=59 // pred_check
          %p471 = pneg %p95
        $region66: #{tpu_custom_call.1} parent=59 // pred_check_branch
          %473 = sbr.rel (%p471) target = $region68
        $region67: #{tpu_custom_call.1} parent=59 // pred_region
          %474 = dma.done %s467, 1024
        $region68: #{tpu_custom_call.1} parent=59 // pred_fallthru
          _
        // Predicated region
        $region69: #{tpu_custom_call.1} parent=59 // pred_check
          %p475 = pneg %p116
        $region70: #{tpu_custom_call.1} parent=59 // pred_check_branch
          %477 = sbr.rel (%p475) target = $region72
        $region71: #{tpu_custom_call.1} parent=59 // pred_region
          %478 = dma.done [#allocation10], 1024
        $region72: #{tpu_custom_call.1} parent=59 // pred_fallthru
          _
        // Predicated region
        $region73: #{tpu_custom_call.1} parent=59 // pred_check
          %p479 = pneg %p137
        $region74: #{tpu_custom_call.1} parent=59 // pred_check_branch
          %481 = sbr.rel (%p479) target = $region76
        $region75: #{tpu_custom_call.1} parent=59 // pred_region
          %482 = dma.done [#allocation13], 64
        $region76: #{tpu_custom_call.1} parent=59 // pred_fallthru
          _
        // Predicated region
        $region77: #{tpu_custom_call.1} parent=59 // pred_check
          %p483 = pneg %p158
        $region78: #{tpu_custom_call.1} parent=59 // pred_check_branch
          %485 = sbr.rel (%p483) target = $region80
        $region79: #{tpu_custom_call.1} parent=59 // pred_region
          %486 = dma.done [#allocation13], 768
        $region80: #{tpu_custom_call.1} parent=59 // pred_fallthru
          _
        // Predicated region
        $region81: #{tpu_custom_call.1} parent=59 // pred_check
          %p487 = pneg %p179
        $region82: #{tpu_custom_call.1} parent=59 // pred_check_branch
          %489 = sbr.rel (%p487) target = $region84
        $region83: #{tpu_custom_call.1} parent=59 // pred_region
          %490 = dma.done [#allocation16], 64
        $region84: #{tpu_custom_call.1} parent=59 // pred_fallthru
          _
        // Predicated region
        $region85: #{tpu_custom_call.1} parent=59 // pred_check
          %p491 = pneg %p200
        $region86: #{tpu_custom_call.1} parent=59 // pred_check_branch
          %493 = sbr.rel (%p491) target = $region88
        $region87: #{tpu_custom_call.1} parent=59 // pred_region
          %494 = dma.done [#allocation16], 768
        $region88: #{tpu_custom_call.1} parent=59 // pred_fallthru
          _
        // Predicated region
        $region89: #{tpu_custom_call.1} parent=59 // pred_check
          %p495 = pneg %p221
        $region90: #{tpu_custom_call.1} parent=59 // pred_check_branch
          %497 = sbr.rel (%p495) target = $region92
        $region91: #{tpu_custom_call.1} parent=59 // pred_region
          %498 = dma.done [#allocation19], 64
        $region92: #{tpu_custom_call.1} parent=59 // pred_fallthru
          _
        // Predicated region
        $region93: #{tpu_custom_call.1} parent=59 // pred_check
          %p499 = pneg %p242
        $region94: #{tpu_custom_call.1} parent=59 // pred_check_branch
          %501 = sbr.rel (%p499) target = $region96
        $region95: #{tpu_custom_call.1} parent=59 // pred_region
          %502 = dma.done [#allocation19], 4096
        $region96: #{tpu_custom_call.1} parent=59 // pred_fallthru
          _
        // Predicated region
        $region97: #{tpu_custom_call.1} parent=59 // pred_check
          %p503 = pneg %p263
        $region98: #{tpu_custom_call.1} parent=59 // pred_check_branch
          %505 = sbr.rel (%p503) target = $region100
        $region99: #{tpu_custom_call.1} parent=59 // pred_region
          %506 = dma.done [#allocation22], 16
        $region100: #{tpu_custom_call.1} parent=59 // pred_fallthru
          _
        %s507 = sand.u32 %s56, 1
        %s508 = scalar_lea.sflag [#allocation7], %s507
        %s509 = sand.u32 %s56, 1
        %s510 = smul.addr %s509, 8
        %s511 = scalar_lea.vmem [#allocation6], %s510
        %p512 = pneg %p69
        %p513 = pneg %p66
        %s514 = sand.u32 %s34, 1
        %s515 = scalar_lea.sflag [#allocation10], %s514
        %s516 = sand.u32 %s82, 1
        %s517 = smul.addr %s516, 64
        %s518 = scalar_lea.vmem [#allocation9], %s517
        %p519 = pneg %p95
        %p520 = pneg %p92
        %p521 = pneg %p116
        %p522 = pneg %p113
        %p523 = pneg %p137
        %p524 = pneg %p134
        %p525 = pneg %p158
        %p526 = pneg %p155
        %p527 = pneg %p179
        %p528 = pneg %p176
        %p529 = pneg %p200
        %p530 = pneg %p197
        %p531 = pneg %p221
        %p532 = pneg %p218
        %p533 = pneg %p242
        %p534 = pneg %p239
        %p535 = pneg %p263
        %p536 = pneg %p260
        %p537 = pneg %p291
        %p538 = pneg %p288
        %s539 = sand.u32 %s278, 1
        %s540 = scalar_lea.sflag [#allocation8], %s539
        %s541 = sand.u32 %s278, 1
        %s542 = smul.addr %s541, 16
        %s543 = scalar_lea.vmem [#allocation23], %s542
        %s544 = smul.u32 2, %s39
        %s545 = smul.u32 2, %s39
        %p547 = scmp.eq.s32.totalorder %s39, 0
        // Predicated region
        $region101: #{tpu_custom_call.1} parent=59 // pred_check
          %p548 = pneg %p547
        $region102: #{tpu_custom_call.1} parent=59 // pred_check_branch
          %550 = sbr.rel (%p548) target = $region104
        $region103: #{tpu_custom_call.1} parent=59 // pred_region
          %v551 = vld [vmem:[%s470] sm:$0xf]
          %v552 = vld [vmem:[%s470 + $0x4] sm:$0xf]
          %v553 = vld [vmem:[%s470 + $0x8] sm:$0xf]
          %v554 = vld [vmem:[%s470 + $0xc] sm:$0xf]
          %v555 = vld [vmem:[%s470 + $0x10] sm:$0xf]
          %v556 = vld [vmem:[%s470 + $0x14] sm:$0xf]
          %v557 = vld [vmem:[%s470 + $0x18] sm:$0xf]
          %v558 = vld [vmem:[%s470 + $0x1c] sm:$0xf]
          %v559 = vld [vmem:[%s470 + $0x20] sm:$0xf]
          %v560 = vld [vmem:[%s470 + $0x24] sm:$0xf]
          %v561 = vld [vmem:[%s470 + $0x28] sm:$0xf]
          %v562 = vld [vmem:[%s470 + $0x2c] sm:$0xf]
          %v563 = vld [vmem:[%s470 + $0x30] sm:$0xf]
          %v564 = vld [vmem:[%s470 + $0x34] sm:$0xf]
          %v565 = vld [vmem:[%s470 + $0x38] sm:$0xf]
          %v566 = vld [vmem:[%s470 + $0x3c] sm:$0xf]
          %v567 = vld [vmem:[#allocation14] sm:$0xff]
          %v568 = vld [vmem:[#allocation14 + $0x8] sm:$0xff]
          %v569 = vld [vmem:[#allocation14 + $0x10] sm:$0xff]
          %v570 = vld [vmem:[#allocation14 + $0x18] sm:$0xff]
          %v571 = vld [vmem:[#allocation14 + $0x20] sm:$0xff]
          %v572 = vld [vmem:[#allocation14 + $0x28] sm:$0xff]
          %v573 = vld [vmem:[#allocation15] sm:$0xf]
          %v575 = vlaneseq
          %v576 = vshrl.u32 %v575, 7
          %v577 = vsub.s32 0, %v576
          %v578 = vrot.slane %v573, %v577
          %v579 = vlaneseq
          %v580 = vshrl.u32 %v579, 7
          %v581 = vsub.s32 1, %v580
          %v582 = vrot.slane %v573, %v581
          %v583 = vlaneseq
          %v584 = vshrl.u32 %v583, 7
          %v585 = vsub.s32 2, %v584
          %v586 = vrot.slane %v573, %v585
          %v587 = vlaneseq
          %v588 = vshrl.u32 %v587, 7
          %v589 = vsub.s32 3, %v588
          %v590 = vrot.slane %v573, %v589
          %v611 = vunpack.c.l.b16 %v551
          %v612 = vunpack.c.l.b16 %v552
          %v613 = vunpack.c.l.b16 %v553
          %v614 = vunpack.c.l.b16 %v554
          %v615 = vunpack.c.l.b16 %v555
          %v616 = vunpack.c.l.b16 %v556
          %v617 = vunpack.c.l.b16 %v557
          %v618 = vunpack.c.l.b16 %v558
          %v619 = vunpack.c.l.b16 %v559
          %v620 = vunpack.c.l.b16 %v560
          %v621 = vunpack.c.l.b16 %v561
          %v622 = vunpack.c.l.b16 %v562
          %v623 = vunpack.c.l.b16 %v563
          %v624 = vunpack.c.l.b16 %v564
          %v625 = vunpack.c.l.b16 %v565
          %v626 = vunpack.c.l.b16 %v566
          %v627 = vpack.c.b16 %v612, %v611
          %v628 = vpack.c.b16 %v614, %v613
          %v629 = vpack.c.b16 %v616, %v615
          %v630 = vpack.c.b16 %v618, %v617
          %v631 = vpack.c.b16 %v620, %v619
          %v632 = vpack.c.b16 %v622, %v621
          %v633 = vpack.c.b16 %v624, %v623
          %v634 = vpack.c.b16 %v626, %v625
          %v641 = vunpack.c.l.b16 %v567
          %v642 = vunpack.c.h.b16 %v567
          %v643 = vunpack.c.l.b16 %v568
          %v644 = vunpack.c.h.b16 %v568
          %v645 = vunpack.c.l.b16 %v569
          %v646 = vunpack.c.h.b16 %v569
          %v647 = vunpack.c.l.b16 %v570
          %v648 = vunpack.c.h.b16 %v570
          %v649 = vunpack.c.l.b16 %v571
          %v650 = vunpack.c.h.b16 %v571
          %v651 = vunpack.c.l.b16 %v572
          %v652 = vunpack.c.h.b16 %v572
          %v653 = vpack.c.b16 %v645, %v641
          %v654 = vpack.c.b16 %v646, %v642
          %v655 = vpack.c.b16 %v647, %v643
          %v656 = vpack.c.b16 %v648, %v644
          %v657 = vpack.c.b16 %v649, %v649
          %v658 = vpack.c.b16 %v650, %v650
          %v659 = vpack.c.b16 %v651, %v651
          %v660 = vpack.c.b16 %v652, %v652
          %vm665 = vcmask 195584
          %v667 = vsel %vm665, %v627, 0
          %v670 = vsel %vm665, %v628, 0
          %v673 = vsel %vm665, %v629, 0
          %v676 = vsel %vm665, %v630, 0
          %v679 = vsel %vm665, %v631, 0
          %v682 = vsel %vm665, %v632, 0
          %v685 = vsel %vm665, %v633, 0
          %v688 = vsel %vm665, %v634, 0
          %vm690 = vcmask 1043456
          %v692 = vsel %vm690, %v657, 0
          %v695 = vsel %vm690, %v658, 0
          %v698 = vsel %vm690, %v659, 0
          %v701 = vsel %vm690, %v660, 0
          %703 = vmatprep.subr.bf16.mxu0 %v654
          %704 = vmatpush1.bf16.msra.mxu0 %v653
          %705 = vmatprep.subr.bf16.mxu0 %v695
          %706 = vmatpush1.bf16.msra.mxu0 %v692
          %707 = vmatprep.subr.bf16.mxu0 0
          %708 = vmatpush1.bf16.msra.mxu0 0
          %709 = vmatprep.subr.bf16.mxu0 0
          %710 = vmatpush1.bf16.msra.mxu0 0
          %711 = vmatprep.subr.bf16.mxu0 0
          %712 = vmatpush1.bf16.msra.mxu0 0
          %713 = vmatprep.subr.bf16.mxu0 0
          %714 = vmatpush1.bf16.msra.mxu0 0
          %715 = vmatprep.subr.bf16.mxu0 0
          %716 = vmatpush1.bf16.msra.mxu0 0
          %717 = vmatprep.subr.bf16.mxu0 0
          %718 = vmatpush1.bf16.msra.mxu0 0
          %719 = vmatprep.subr.bf16.mxu0 0
          %720 = vmatpush1.bf16.msra.mxu0 0
          %721 = vmatprep.subr.bf16.mxu0 0
          %722 = vmatpush1.bf16.msra.mxu0 0
          %723 = vmatprep.subr.bf16.mxu0 0
          %724 = vmatpush1.bf16.msra.mxu0 0
          %725 = vmatprep.subr.bf16.mxu0 0
          %726 = vmatpush1.bf16.msra.mxu0 0
          %727 = vmatprep.subr.bf16.mxu0 0
          %728 = vmatpush1.bf16.msra.mxu0 0
          %729 = vmatprep.subr.bf16.mxu0 0
          %730 = vmatpush1.bf16.msra.mxu0 0
          %731 = vmatprep.subr.bf16.mxu0 0
          %732 = vmatpush1.bf16.msra.mxu0 0
          %733 = vmatprep.subr.bf16.mxu0 0
          %734 = vmatpush1.bf16.msra.mxu0 0
          %735 = vmatprep.mubr.bf16.mxu0 0
          %736 = vmatmul.mubr.bf16.gmra.mrb[0].mxu0 %v667
          %v737 = vpop.f32.mrb[0].mxu0
          %v738 = vadd.f32 %v578, %v737
          %v739 = vpop.f32.mrb[0].mxu0
          %v740 = vadd.f32 %v582, %v739
          %v741 = vpop.f32.mrb[0].mxu0
          %v742 = vadd.f32 %v578, %v741
          %v743 = vpop.f32.mrb[0].mxu0
          %v744 = vadd.f32 %v582, %v743
          %745 = vmatprep.mubr.bf16.mxu0 0
          %746 = vmatmul.mubr.bf16.gmra.mrb[0].mxu0 %v670
          %v747 = vpop.f32.mrb[0].mxu0
          %v748 = vadd.f32 %v578, %v747
          %v749 = vpop.f32.mrb[0].mxu0
          %v750 = vadd.f32 %v582, %v749
          %v751 = vpop.f32.mrb[0].mxu0
          %v752 = vadd.f32 %v578, %v751
          %v753 = vpop.f32.mrb[0].mxu0
          %v754 = vadd.f32 %v582, %v753
          %755 = vmatprep.mubr.bf16.mxu0 0
          %756 = vmatmul.mubr.bf16.gmra.mrb[0].mxu0 %v673
          %v757 = vpop.f32.mrb[0].mxu0
          %v758 = vadd.f32 %v578, %v757
          %v759 = vpop.f32.mrb[0].mxu0
          %v760 = vadd.f32 %v582, %v759
          %v761 = vpop.f32.mrb[0].mxu0
          %v762 = vadd.f32 %v578, %v761
          %v763 = vpop.f32.mrb[0].mxu0
          %v764 = vadd.f32 %v582, %v763
          %765 = vmatprep.mubr.bf16.mxu0 0
          %766 = vmatmul.mubr.bf16.gmra.mrb[0].mxu0 %v676
          %v767 = vpop.f32.mrb[0].mxu0
          %v768 = vadd.f32 %v578, %v767
          %v769 = vpop.f32.mrb[0].mxu0
          %v770 = vadd.f32 %v582, %v769
          %v771 = vpop.f32.mrb[0].mxu0
          %v772 = vadd.f32 %v578, %v771
          %v773 = vpop.f32.mrb[0].mxu0
          %v774 = vadd.f32 %v582, %v773
          %775 = vmatprep.mubr.bf16.mxu0 0
          %776 = vmatmul.mubr.bf16.gmra.mrb[0].mxu0 %v679
          %v777 = vpop.f32.mrb[0].mxu0
          %v778 = vadd.f32 %v578, %v777
          %v779 = vpop.f32.mrb[0].mxu0
          %v780 = vadd.f32 %v582, %v779
          %v781 = vpop.f32.mrb[0].mxu0
          %v782 = vadd.f32 %v578, %v781
          %v783 = vpop.f32.mrb[0].mxu0
          %v784 = vadd.f32 %v582, %v783
          %785 = vmatprep.mubr.bf16.mxu0 0
          %786 = vmatmul.mubr.bf16.gmra.mrb[0].mxu0 %v682
          %v787 = vpop.f32.mrb[0].mxu0
          %v788 = vadd.f32 %v578, %v787
          %v789 = vpop.f32.mrb[0].mxu0
          %v790 = vadd.f32 %v582, %v789
          %v791 = vpop.f32.mrb[0].mxu0
          %v792 = vadd.f32 %v578, %v791
          %v793 = vpop.f32.mrb[0].mxu0
          %v794 = vadd.f32 %v582, %v793
          %795 = vmatprep.mubr.bf16.mxu0 0
          %796 = vmatmul.mubr.bf16.gmra.mrb[0].mxu0 %v685
          %v797 = vpop.f32.mrb[0].mxu0
          %v798 = vadd.f32 %v578, %v797
          %v799 = vpop.f32.mrb[0].mxu0
          %v800 = vadd.f32 %v582, %v799
          %v801 = vpop.f32.mrb[0].mxu0
          %v802 = vadd.f32 %v578, %v801
          %v803 = vpop.f32.mrb[0].mxu0
          %v804 = vadd.f32 %v582, %v803
          %805 = vmatprep.mubr.bf16.mxu0 0
          %806 = vmatmul.mubr.bf16.gmra.mrb[0].mxu0 %v688
          %v807 = vpop.f32.mrb[0].mxu0
          %v808 = vadd.f32 %v578, %v807
          %v809 = vpop.f32.mrb[0].mxu0
          %v810 = vadd.f32 %v582, %v809
          %v811 = vpop.f32.mrb[0].mxu0
          %v812 = vadd.f32 %v578, %v811
          %v813 = vpop.f32.mrb[0].mxu0
          %v814 = vadd.f32 %v582, %v813
          %815 = vdwg.mxu0
          %816 = vmatprep.subr.bf16.mxu0 %v656
          %817 = vmatpush1.bf16.msra.mxu0 %v655
          %818 = vmatprep.subr.bf16.mxu0 %v701
          %819 = vmatpush1.bf16.msra.mxu0 %v698
          %820 = vmatprep.subr.bf16.mxu0 0
          %821 = vmatpush1.bf16.msra.mxu0 0
          %822 = vmatprep.subr.bf16.mxu0 0
          %823 = vmatpush1.bf16.msra.mxu0 0
          %824 = vmatprep.subr.bf16.mxu0 0
          %825 = vmatpush1.bf16.msra.mxu0 0
          %826 = vmatprep.subr.bf16.mxu0 0
          %827 = vmatpush1.bf16.msra.mxu0 0
          %828 = vmatprep.subr.bf16.mxu0 0
          %829 = vmatpush1.bf16.msra.mxu0 0
          %830 = vmatprep.subr.bf16.mxu0 0
          %831 = vmatpush1.bf16.msra.mxu0 0
          %832 = vmatprep.subr.bf16.mxu0 0
          %833 = vmatpush1.bf16.msra.mxu0 0
          %834 = vmatprep.subr.bf16.mxu0 0
          %835 = vmatpush1.bf16.msra.mxu0 0
          %836 = vmatprep.subr.bf16.mxu0 0
          %837 = vmatpush1.bf16.msra.mxu0 0
          %838 = vmatprep.subr.bf16.mxu0 0
          %839 = vmatpush1.bf16.msra.mxu0 0
          %840 = vmatprep.subr.bf16.mxu0 0
          %841 = vmatpush1.bf16.msra.mxu0 0
          %842 = vmatprep.subr.bf16.mxu0 0
          %843 = vmatpush1.bf16.msra.mxu0 0
          %844 = vmatprep.subr.bf16.mxu0 0
          %845 = vmatpush1.bf16.msra.mxu0 0
          %846 = vmatprep.subr.bf16.mxu0 0
          %847 = vmatpush1.bf16.msra.mxu0 0
          %848 = vmatprep.mubr.bf16.mxu0 0
          %849 = vmatmul.mubr.bf16.gmra.mrb[0].mxu0 %v667
          %v850 = vpop.f32.mrb[0].mxu0
          %v851 = vadd.f32 %v586, %v850
          %v852 = vpop.f32.mrb[0].mxu0
          %v853 = vadd.f32 %v590, %v852
          %v854 = vpop.f32.mrb[0].mxu0
          %v855 = vadd.f32 %v586, %v854
          %v856 = vpop.f32.mrb[0].mxu0
          %v857 = vadd.f32 %v590, %v856
          %858 = vmatprep.mubr.bf16.mxu0 0
          %859 = vmatmul.mubr.bf16.gmra.mrb[0].mxu0 %v670
          %v860 = vpop.f32.mrb[0].mxu0
          %v861 = vadd.f32 %v586, %v860
          %v862 = vpop.f32.mrb[0].mxu0
          %v863 = vadd.f32 %v590, %v862
          %v864 = vpop.f32.mrb[0].mxu0
          %v865 = vadd.f32 %v586, %v864
          %v866 = vpop.f32.mrb[0].mxu0
          %v867 = vadd.f32 %v590, %v866
          %868 = vmatprep.mubr.bf16.mxu0 0
          %869 = vmatmul.mubr.bf16.gmra.mrb[0].mxu0 %v673
          %v870 = vpop.f32.mrb[0].mxu0
          %v871 = vadd.f32 %v586, %v870
          %v872 = vpop.f32.mrb[0].mxu0
          %v873 = vadd.f32 %v590, %v872
          %v874 = vpop.f32.mrb[0].mxu0
          %v875 = vadd.f32 %v586, %v874
          %v876 = vpop.f32.mrb[0].mxu0
          %v877 = vadd.f32 %v590, %v876
          %878 = vmatprep.mubr.bf16.mxu0 0
          %879 = vmatmul.mubr.bf16.gmra.mrb[0].mxu0 %v676
          %v880 = vpop.f32.mrb[0].mxu0
          %v881 = vadd.f32 %v586, %v880
          %v882 = vpop.f32.mrb[0].mxu0
          %v883 = vadd.f32 %v590, %v882
          %v884 = vpop.f32.mrb[0].mxu0
          %v885 = vadd.f32 %v586, %v884
          %v886 = vpop.f32.mrb[0].mxu0
          %v887 = vadd.f32 %v590, %v886
          %888 = vmatprep.mubr.bf16.mxu0 0
          %889 = vmatmul.mubr.bf16.gmra.mrb[0].mxu0 %v679
          %v890 = vpop.f32.mrb[0].mxu0
          %v891 = vadd.f32 %v586, %v890
          %v892 = vpop.f32.mrb[0].mxu0
          %v893 = vadd.f32 %v590, %v892
          %v894 = vpop.f32.mrb[0].mxu0
          %v895 = vadd.f32 %v586, %v894
          %v896 = vpop.f32.mrb[0].mxu0
          %v897 = vadd.f32 %v590, %v896
          %898 = vmatprep.mubr.bf16.mxu0 0
          %899 = vmatmul.mubr.bf16.gmra.mrb[0].mxu0 %v682
          %v900 = vpop.f32.mrb[0].mxu0
          %v901 = vadd.f32 %v586, %v900
          %v902 = vpop.f32.mrb[0].mxu0
          %v903 = vadd.f32 %v590, %v902
          %v904 = vpop.f32.mrb[0].mxu0
          %v905 = vadd.f32 %v586, %v904
          %v906 = vpop.f32.mrb[0].mxu0
          %v907 = vadd.f32 %v590, %v906
          %908 = vmatprep.mubr.bf16.mxu0 0
          %909 = vmatmul.mubr.bf16.gmra.mrb[0].mxu0 %v685
          %v910 = vpop.f32.mrb[0].mxu0
          %v911 = vadd.f32 %v586, %v910
          %v912 = vpop.f32.mrb[0].mxu0
          %v913 = vadd.f32 %v590, %v912
          %v914 = vpop.f32.mrb[0].mxu0
          %v915 = vadd.f32 %v586, %v914
          %v916 = vpop.f32.mrb[0].mxu0
          %v917 = vadd.f32 %v590, %v916
          %918 = vmatprep.mubr.bf16.mxu0 0
          %919 = vmatmul.mubr.bf16.gmra.mrb[0].mxu0 %v688
          %v920 = vpop.f32.mrb[0].mxu0
          %v921 = vadd.f32 %v586, %v920
          %v922 = vpop.f32.mrb[0].mxu0
          %v923 = vadd.f32 %v590, %v922
          %v924 = vpop.f32.mrb[0].mxu0
          %v925 = vadd.f32 %v586, %v924
          %v926 = vpop.f32.mrb[0].mxu0
          %v927 = vadd.f32 %v590, %v926
          %928 = vdwg.mxu0
          %v929 = vld [vmem:[#allocation17] sm:$0xff]
          %v930 = vld [vmem:[#allocation17 + $0x8] sm:$0xff]
          %v931 = vld [vmem:[#allocation17 + $0x10] sm:$0xff]
          %v932 = vld [vmem:[#allocation17 + $0x18] sm:$0xff]
          %v933 = vld [vmem:[#allocation17 + $0x20] sm:$0xff]
          %v934 = vld [vmem:[#allocation17 + $0x28] sm:$0xff]
          %v935 = vld [vmem:[#allocation18] sm:$0xf]
          %v937 = vlaneseq
          %v938 = vshrl.u32 %v937, 7
          %v939 = vsub.s32 0, %v938
          %v940 = vrot.slane %v935, %v939
          %v941 = vlaneseq
          %v942 = vshrl.u32 %v941, 7
          %v943 = vsub.s32 1, %v942
          %v944 = vrot.slane %v935, %v943
          %v945 = vlaneseq
          %v946 = vshrl.u32 %v945, 7
          %v947 = vsub.s32 2, %v946
          %v948 = vrot.slane %v935, %v947
          %v949 = vlaneseq
          %v950 = vshrl.u32 %v949, 7
          %v951 = vsub.s32 3, %v950
          %v952 = vrot.slane %v935, %v951
          %v963 = vunpack.c.l.b16 %v929
          %v964 = vunpack.c.h.b16 %v929
          %v965 = vunpack.c.l.b16 %v930
          %v966 = vunpack.c.h.b16 %v930
          %v967 = vunpack.c.l.b16 %v931
          %v968 = vunpack.c.h.b16 %v931
          %v969 = vunpack.c.l.b16 %v932
          %v970 = vunpack.c.h.b16 %v932
          %v971 = vunpack.c.l.b16 %v933
          %v972 = vunpack.c.h.b16 %v933
          %v973 = vunpack.c.l.b16 %v934
          %v974 = vunpack.c.h.b16 %v934
          %v975 = vpack.c.b16 %v967, %v963
          %v976 = vpack.c.b16 %v968, %v964
          %v977 = vpack.c.b16 %v969, %v965
          %v978 = vpack.c.b16 %v970, %v966
          %v979 = vpack.c.b16 %v971, %v971
          %v980 = vpack.c.b16 %v972, %v972
          %v981 = vpack.c.b16 %v973, %v973
          %v982 = vpack.c.b16 %v974, %v974
          %v988 = vsel %vm690, %v979, 0
          %v991 = vsel %vm690, %v980, 0
          %v994 = vsel %vm690, %v981, 0
          %v997 = vsel %vm690, %v982, 0
          %999 = vmatprep.subr.bf16.mxu0 %v976
          %1000 = vmatpush1.bf16.msra.mxu0 %v975
          %1001 = vmatprep.subr.bf16.mxu0 %v991
          %1002 = vmatpush1.bf16.msra.mxu0 %v988
          %1003 = vmatprep.subr.bf16.mxu0 0
          %1004 = vmatpush1.bf16.msra.mxu0 0
          %1005 = vmatprep.subr.bf16.mxu0 0
          %1006 = vmatpush1.bf16.msra.mxu0 0
          %1007 = vmatprep.subr.bf16.mxu0 0
          %1008 = vmatpush1.bf16.msra.mxu0 0
          %1009 = vmatprep.subr.bf16.mxu0 0
          %1010 = vmatpush1.bf16.msra.mxu0 0
          %1011 = vmatprep.subr.bf16.mxu0 0
          %1012 = vmatpush1.bf16.msra.mxu0 0
          %1013 = vmatprep.subr.bf16.mxu0 0
          %1014 = vmatpush1.bf16.msra.mxu0 0
          %1015 = vmatprep.subr.bf16.mxu0 0
          %1016 = vmatpush1.bf16.msra.mxu0 0
          %1017 = vmatprep.subr.bf16.mxu0 0
          %1018 = vmatpush1.bf16.msra.mxu0 0
          %1019 = vmatprep.subr.bf16.mxu0 0
          %1020 = vmatpush1.bf16.msra.mxu0 0
          %1021 = vmatprep.subr.bf16.mxu0 0
          %1022 = vmatpush1.bf16.msra.mxu0 0
          %1023 = vmatprep.subr.bf16.mxu0 0
          %1024 = vmatpush1.bf16.msra.mxu0 0
          %1025 = vmatprep.subr.bf16.mxu0 0
          %1026 = vmatpush1.bf16.msra.mxu0 0
          %1027 = vmatprep.subr.bf16.mxu0 0
          %1028 = vmatpush1.bf16.msra.mxu0 0
          %1029 = vmatprep.subr.bf16.mxu0 0
          %1030 = vmatpush1.bf16.msra.mxu0 0
          %1031 = vmatprep.mubr.bf16.mxu0 0
          %1032 = vmatmul.mubr.bf16.gmra.mrb[0].mxu0 %v667
          %v1033 = vpop.f32.mrb[0].mxu0
          %v1034 = vadd.f32 %v940, %v1033
          %v1035 = vpop.f32.mrb[0].mxu0
          %v1036 = vadd.f32 %v944, %v1035
          %v1037 = vpop.f32.mrb[0].mxu0
          %v1038 = vadd.f32 %v940, %v1037
          %v1039 = vpop.f32.mrb[0].mxu0
          %v1040 = vadd.f32 %v944, %v1039
          %1041 = vmatprep.mubr.bf16.mxu0 0
          %1042 = vmatmul.mubr.bf16.gmra.mrb[0].mxu0 %v670
          %v1043 = vpop.f32.mrb[0].mxu0
          %v1044 = vadd.f32 %v940, %v1043
          %v1045 = vpop.f32.mrb[0].mxu0
          %v1046 = vadd.f32 %v944, %v1045
          %v1047 = vpop.f32.mrb[0].mxu0
          %v1048 = vadd.f32 %v940, %v1047
          %v1049 = vpop.f32.mrb[0].mxu0
          %v1050 = vadd.f32 %v944, %v1049
          %1051 = vmatprep.mubr.bf16.mxu0 0
          %1052 = vmatmul.mubr.bf16.gmra.mrb[0].mxu0 %v673
          %v1053 = vpop.f32.mrb[0].mxu0
          %v1054 = vadd.f32 %v940, %v1053
          %v1055 = vpop.f32.mrb[0].mxu0
          %v1056 = vadd.f32 %v944, %v1055
          %v1057 = vpop.f32.mrb[0].mxu0
          %v1058 = vadd.f32 %v940, %v1057
          %v1059 = vpop.f32.mrb[0].mxu0
          %v1060 = vadd.f32 %v944, %v1059
          %1061 = vmatprep.mubr.bf16.mxu0 0
          %1062 = vmatmul.mubr.bf16.gmra.mrb[0].mxu0 %v676
          %v1063 = vpop.f32.mrb[0].mxu0
          %v1064 = vadd.f32 %v940, %v1063
          %v1065 = vpop.f32.mrb[0].mxu0
          %v1066 = vadd.f32 %v944, %v1065
          %v1067 = vpop.f32.mrb[0].mxu0
          %v1068 = vadd.f32 %v940, %v1067
          %v1069 = vpop.f32.mrb[0].mxu0
          %v1070 = vadd.f32 %v944, %v1069
          %1071 = vmatprep.mubr.bf16.mxu0 0
          %1072 = vmatmul.mubr.bf16.gmra.mrb[0].mxu0 %v679
          %v1073 = vpop.f32.mrb[0].mxu0
          %v1074 = vadd.f32 %v940, %v1073
          %v1075 = vpop.f32.mrb[0].mxu0
          %v1076 = vadd.f32 %v944, %v1075
          %v1077 = vpop.f32.mrb[0].mxu0
          %v1078 = vadd.f32 %v940, %v1077
          %v1079 = vpop.f32.mrb[0].mxu0
          %v1080 = vadd.f32 %v944, %v1079
          %1081 = vmatprep.mubr.bf16.mxu0 0
          %1082 = vmatmul.mubr.bf16.gmra.mrb[0].mxu0 %v682
          %v1083 = vpop.f32.mrb[0].mxu0
          %v1084 = vadd.f32 %v940, %v1083
          %v1085 = vpop.f32.mrb[0].mxu0
          %v1086 = vadd.f32 %v944, %v1085
          %v1087 = vpop.f32.mrb[0].mxu0
          %v1088 = vadd.f32 %v940, %v1087
          %v1089 = vpop.f32.mrb[0].mxu0
          %v1090 = vadd.f32 %v944, %v1089
          %1091 = vmatprep.mubr.bf16.mxu0 0
          %1092 = vmatmul.mubr.bf16.gmra.mrb[0].mxu0 %v685
          %v1093 = vpop.f32.mrb[0].mxu0
          %v1094 = vadd.f32 %v940, %v1093
          %v1095 = vpop.f32.mrb[0].mxu0
          %v1096 = vadd.f32 %v944, %v1095
          %v1097 = vpop.f32.mrb[0].mxu0
          %v1098 = vadd.f32 %v940, %v1097
          %v1099 = vpop.f32.mrb[0].mxu0
          %v1100 = vadd.f32 %v944, %v1099
          %1101 = vmatprep.mubr.bf16.mxu0 0
          %1102 = vmatmul.mubr.bf16.gmra.mrb[0].mxu0 %v688
          %v1103 = vpop.f32.mrb[0].mxu0
          %v1104 = vadd.f32 %v940, %v1103
          %v1105 = vpop.f32.mrb[0].mxu0
          %v1106 = vadd.f32 %v944, %v1105
          %v1107 = vpop.f32.mrb[0].mxu0
          %v1108 = vadd.f32 %v940, %v1107
          %v1109 = vpop.f32.mrb[0].mxu0
          %v1110 = vadd.f32 %v944, %v1109
          %1111 = vdwg.mxu0
          %1112 = vmatprep.subr.bf16.mxu0 %v978
          %1113 = vmatpush1.bf16.msra.mxu0 %v977
          %1114 = vmatprep.subr.bf16.mxu0 %v997
          %1115 = vmatpush1.bf16.msra.mxu0 %v994
          %1116 = vmatprep.subr.bf16.mxu0 0
          %1117 = vmatpush1.bf16.msra.mxu0 0
          %1118 = vmatprep.subr.bf16.mxu0 0
          %1119 = vmatpush1.bf16.msra.mxu0 0
          %1120 = vmatprep.subr.bf16.mxu0 0
          %1121 = vmatpush1.bf16.msra.mxu0 0
          %1122 = vmatprep.subr.bf16.mxu0 0
          %1123 = vmatpush1.bf16.msra.mxu0 0
          %1124 = vmatprep.subr.bf16.mxu0 0
          %1125 = vmatpush1.bf16.msra.mxu0 0
          %1126 = vmatprep.subr.bf16.mxu0 0
          %1127 = vmatpush1.bf16.msra.mxu0 0
          %1128 = vmatprep.subr.bf16.mxu0 0
          %1129 = vmatpush1.bf16.msra.mxu0 0
          %1130 = vmatprep.subr.bf16.mxu0 0
          %1131 = vmatpush1.bf16.msra.mxu0 0
          %1132 = vmatprep.subr.bf16.mxu0 0
          %1133 = vmatpush1.bf16.msra.mxu0 0
          %1134 = vmatprep.subr.bf16.mxu0 0
          %1135 = vmatpush1.bf16.msra.mxu0 0
          %1136 = vmatprep.subr.bf16.mxu0 0
          %1137 = vmatpush1.bf16.msra.mxu0 0
          %1138 = vmatprep.subr.bf16.mxu0 0
          %1139 = vmatpush1.bf16.msra.mxu0 0
          %1140 = vmatprep.subr.bf16.mxu0 0
          %1141 = vmatpush1.bf16.msra.mxu0 0
          %1142 = vmatprep.subr.bf16.mxu0 0
          %1143 = vmatpush1.bf16.msra.mxu0 0
          %1144 = vmatprep.mubr.bf16.mxu0 0
          %1145 = vmatmul.mubr.bf16.gmra.mrb[0].mxu0 %v667
          %v1146 = vpop.f32.mrb[0].mxu0
          %v1147 = vadd.f32 %v948, %v1146
          %v1148 = vpop.f32.mrb[0].mxu0
          %v1149 = vadd.f32 %v952, %v1148
          %v1150 = vpop.f32.mrb[0].mxu0
          %v1151 = vadd.f32 %v948, %v1150
          %v1152 = vpop.f32.mrb[0].mxu0
          %v1153 = vadd.f32 %v952, %v1152
          %1154 = vmatprep.mubr.bf16.mxu0 0
          %1155 = vmatmul.mubr.bf16.gmra.mrb[0].mxu0 %v670
          %v1156 = vpop.f32.mrb[0].mxu0
          %v1157 = vadd.f32 %v948, %v1156
          %v1158 = vpop.f32.mrb[0].mxu0
          %v1159 = vadd.f32 %v952, %v1158
          %v1160 = vpop.f32.mrb[0].mxu0
          %v1161 = vadd.f32 %v948, %v1160
          %v1162 = vpop.f32.mrb[0].mxu0
          %v1163 = vadd.f32 %v952, %v1162
          %1164 = vmatprep.mubr.bf16.mxu0 0
          %1165 = vmatmul.mubr.bf16.gmra.mrb[0].mxu0 %v673
          %v1166 = vpop.f32.mrb[0].mxu0
          %v1167 = vadd.f32 %v948, %v1166
          %v1168 = vpop.f32.mrb[0].mxu0
          %v1169 = vadd.f32 %v952, %v1168
          %v1170 = vpop.f32.mrb[0].mxu0
          %v1171 = vadd.f32 %v948, %v1170
          %v1172 = vpop.f32.mrb[0].mxu0
          %v1173 = vadd.f32 %v952, %v1172
          %1174 = vmatprep.mubr.bf16.mxu0 0
          %1175 = vmatmul.mubr.bf16.gmra.mrb[0].mxu0 %v676
          %v1176 = vpop.f32.mrb[0].mxu0
          %v1177 = vadd.f32 %v948, %v1176
          %v1178 = vpop.f32.mrb[0].mxu0
          %v1179 = vadd.f32 %v952, %v1178
          %v1180 = vpop.f32.mrb[0].mxu0
          %v1181 = vadd.f32 %v948, %v1180
          %v1182 = vpop.f32.mrb[0].mxu0
          %v1183 = vadd.f32 %v952, %v1182
          %1184 = vmatprep.mubr.bf16.mxu0 0
          %1185 = vmatmul.mubr.bf16.gmra.mrb[0].mxu0 %v679
          %v1186 = vpop.f32.mrb[0].mxu0
          %v1187 = vadd.f32 %v948, %v1186
          %v1188 = vpop.f32.mrb[0].mxu0
          %v1189 = vadd.f32 %v952, %v1188
          %v1190 = vpop.f32.mrb[0].mxu0
          %v1191 = vadd.f32 %v948, %v1190
          %v1192 = vpop.f32.mrb[0].mxu0
          %v1193 = vadd.f32 %v952, %v1192
          %1194 = vmatprep.mubr.bf16.mxu0 0
          %1195 = vmatmul.mubr.bf16.gmra.mrb[0].mxu0 %v682
          %v1196 = vpop.f32.mrb[0].mxu0
          %v1197 = vadd.f32 %v948, %v1196
          %v1198 = vpop.f32.mrb[0].mxu0
          %v1199 = vadd.f32 %v952, %v1198
          %v1200 = vpop.f32.mrb[0].mxu0
          %v1201 = vadd.f32 %v948, %v1200
          %v1202 = vpop.f32.mrb[0].mxu0
          %v1203 = vadd.f32 %v952, %v1202
          %1204 = vmatprep.mubr.bf16.mxu0 0
          %1205 = vmatmul.mubr.bf16.gmra.mrb[0].mxu0 %v685
          %v1206 = vpop.f32.mrb[0].mxu0
          %v1207 = vadd.f32 %v948, %v1206
          %v1208 = vpop.f32.mrb[0].mxu0
          %v1209 = vadd.f32 %v952, %v1208
          %v1210 = vpop.f32.mrb[0].mxu0
          %v1211 = vadd.f32 %v948, %v1210
          %v1212 = vpop.f32.mrb[0].mxu0
          %v1213 = vadd.f32 %v952, %v1212
          %1214 = vmatprep.mubr.bf16.mxu0 0
          %1215 = vmatmul.mubr.bf16.gmra.mrb[0].mxu0 %v688
          %v1216 = vpop.f32.mrb[0].mxu0
          %v1217 = vadd.f32 %v948, %v1216
          %v1218 = vpop.f32.mrb[0].mxu0
          %v1219 = vadd.f32 %v952, %v1218
          %v1220 = vpop.f32.mrb[0].mxu0
          %v1221 = vadd.f32 %v948, %v1220
          %v1222 = vpop.f32.mrb[0].mxu0
          %v1223 = vadd.f32 %v952, %v1222
          %1224 = vdwg.mxu0
          %v1225 = vpack.c.bf16 %v742, %v738
          %v1226 = vpack.c.bf16 %v744, %v740
          %v1227 = vpack.c.bf16 %v855, %v851
          %v1228 = vpack.c.bf16 %v857, %v853
          %v1229 = vpack.c.bf16 %v752, %v748
          %v1230 = vpack.c.bf16 %v754, %v750
          %v1231 = vpack.c.bf16 %v865, %v861
          %v1232 = vpack.c.bf16 %v867, %v863
          %v1233 = vpack.c.bf16 %v762, %v758
          %v1234 = vpack.c.bf16 %v764, %v760
          %v1235 = vpack.c.bf16 %v875, %v871
          %v1236 = vpack.c.bf16 %v877, %v873
          %v1237 = vpack.c.bf16 %v772, %v768
          %v1238 = vpack.c.bf16 %v774, %v770
          %v1239 = vpack.c.bf16 %v885, %v881
          %v1240 = vpack.c.bf16 %v887, %v883
          %v1241 = vpack.c.bf16 %v782, %v778
          %v1242 = vpack.c.bf16 %v784, %v780
          %v1243 = vpack.c.bf16 %v895, %v891
          %v1244 = vpack.c.bf16 %v897, %v893
          %v1245 = vpack.c.bf16 %v792, %v788
          %v1246 = vpack.c.bf16 %v794, %v790
          %v1247 = vpack.c.bf16 %v905, %v901
          %v1248 = vpack.c.bf16 %v907, %v903
          %v1249 = vpack.c.bf16 %v802, %v798
          %v1250 = vpack.c.bf16 %v804, %v800
          %v1251 = vpack.c.bf16 %v915, %v911
          %v1252 = vpack.c.bf16 %v917, %v913
          %v1253 = vpack.c.bf16 %v812, %v808
          %v1254 = vpack.c.bf16 %v814, %v810
          %v1255 = vpack.c.bf16 %v925, %v921
          %v1256 = vpack.c.bf16 %v927, %v923
          %1257 = vst [vmem:[#allocation2] sm:$0xff] %v1225
          %1258 = vst [vmem:[#allocation2 + $0x8] sm:$0xff] %v1226
          %1259 = vst [vmem:[#allocation2 + $0x10] sm:$0xff] %v1227
          %1260 = vst [vmem:[#allocation2 + $0x18] sm:$0xff] %v1228
          %1261 = vst [vmem:[#allocation2 + $0x20] sm:$0xff] %v1229
          %1262 = vst [vmem:[#allocation2 + $0x28] sm:$0xff] %v1230
          %1263 = vst [vmem:[#allocation2 + $0x30] sm:$0xff] %v1231
          %1264 = vst [vmem:[#allocation2 + $0x38] sm:$0xff] %v1232
          %1265 = vst [vmem:[#allocation2 + $0x40] sm:$0xff] %v1233
          %1266 = vst [vmem:[#allocation2 + $0x48] sm:$0xff] %v1234
          %1267 = vst [vmem:[#allocation2 + $0x50] sm:$0xff] %v1235
          %1268 = vst [vmem:[#allocation2 + $0x58] sm:$0xff] %v1236
          %1269 = vst [vmem:[#allocation2 + $0x60] sm:$0xff] %v1237
          %1270 = vst [vmem:[#allocation2 + $0x68] sm:$0xff] %v1238
          %1271 = vst [vmem:[#allocation2 + $0x70] sm:$0xff] %v1239
          %1272 = vst [vmem:[#allocation2 + $0x78] sm:$0xff] %v1240
          %1273 = vst [vmem:[#allocation2 + $0x80] sm:$0xff] %v1241
          %1274 = vst [vmem:[#allocation2 + $0x88] sm:$0xff] %v1242
          %1275 = vst [vmem:[#allocation2 + $0x90] sm:$0xff] %v1243
          %1276 = vst [vmem:[#allocation2 + $0x98] sm:$0xff] %v1244
          %1277 = vst [vmem:[#allocation2 + $0xa0] sm:$0xff] %v1245
          %1278 = vst [vmem:[#allocation2 + $0xa8] sm:$0xff] %v1246
          %1279 = vst [vmem:[#allocation2 + $0xb0] sm:$0xff] %v1247
          %1280 = vst [vmem:[#allocation2 + $0xb8] sm:$0xff] %v1248
          %1281 = vst [vmem:[#allocation2 + $0xc0] sm:$0xff] %v1249
          %1282 = vst [vmem:[#allocation2 + $0xc8] sm:$0xff] %v1250
          %1283 = vst [vmem:[#allocation2 + $0xd0] sm:$0xff] %v1251
          %1284 = vst [vmem:[#allocation2 + $0xd8] sm:$0xff] %v1252
          %1285 = vst [vmem:[#allocation2 + $0xe0] sm:$0xff] %v1253
          %1286 = vst [vmem:[#allocation2 + $0xe8] sm:$0xff] %v1254
          %1287 = vst [vmem:[#allocation2 + $0xf0] sm:$0xff] %v1255
          %1288 = vst [vmem:[#allocation2 + $0xf8] sm:$0xff] %v1256
          %v1289 = vpack.c.bf16 %v1038, %v1034
          %v1290 = vpack.c.bf16 %v1040, %v1036
          %v1291 = vpack.c.bf16 %v1151, %v1147
          %v1292 = vpack.c.bf16 %v1153, %v1149
          %v1293 = vpack.c.bf16 %v1048, %v1044
          %v1294 = vpack.c.bf16 %v1050, %v1046
          %v1295 = vpack.c.bf16 %v1161, %v1157
          %v1296 = vpack.c.bf16 %v1163, %v1159
          %v1297 = vpack.c.bf16 %v1058, %v1054
          %v1298 = vpack.c.bf16 %v1060, %v1056
          %v1299 = vpack.c.bf16 %v1171, %v1167
          %v1300 = vpack.c.bf16 %v1173, %v1169
          %v1301 = vpack.c.bf16 %v1068, %v1064
          %v1302 = vpack.c.bf16 %v1070, %v1066
          %v1303 = vpack.c.bf16 %v1181, %v1177
          %v1304 = vpack.c.bf16 %v1183, %v1179
          %v1305 = vpack.c.bf16 %v1078, %v1074
          %v1306 = vpack.c.bf16 %v1080, %v1076
          %v1307 = vpack.c.bf16 %v1191, %v1187
          %v1308 = vpack.c.bf16 %v1193, %v1189
          %v1309 = vpack.c.bf16 %v1088, %v1084
          %v1310 = vpack.c.bf16 %v1090, %v1086
          %v1311 = vpack.c.bf16 %v1201, %v1197
          %v1312 = vpack.c.bf16 %v1203, %v1199
          %v1313 = vpack.c.bf16 %v1098, %v1094
          %v1314 = vpack.c.bf16 %v1100, %v1096
          %v1315 = vpack.c.bf16 %v1211, %v1207
          %v1316 = vpack.c.bf16 %v1213, %v1209
          %v1317 = vpack.c.bf16 %v1108, %v1104
          %v1318 = vpack.c.bf16 %v1110, %v1106
          %v1319 = vpack.c.bf16 %v1221, %v1217
          %v1320 = vpack.c.bf16 %v1223, %v1219
          %1321 = vst [vmem:[#allocation3] sm:$0xff] %v1289
          %1322 = vst [vmem:[#allocation3 + $0x8] sm:$0xff] %v1290
          %1323 = vst [vmem:[#allocation3 + $0x10] sm:$0xff] %v1291
          %1324 = vst [vmem:[#allocation3 + $0x18] sm:$0xff] %v1292
          %1325 = vst [vmem:[#allocation3 + $0x20] sm:$0xff] %v1293
          %1326 = vst [vmem:[#allocation3 + $0x28] sm:$0xff] %v1294
          %1327 = vst [vmem:[#allocation3 + $0x30] sm:$0xff] %v1295
          %1328 = vst [vmem:[#allocation3 + $0x38] sm:$0xff] %v1296
          %1329 = vst [vmem:[#allocation3 + $0x40] sm:$0xff] %v1297
          %1330 = vst [vmem:[#allocation3 + $0x48] sm:$0xff] %v1298
          %1331 = vst [vmem:[#allocation3 + $0x50] sm:$0xff] %v1299
          %1332 = vst [vmem:[#allocation3 + $0x58] sm:$0xff] %v1300
          %1333 = vst [vmem:[#allocation3 + $0x60] sm:$0xff] %v1301
          %1334 = vst [vmem:[#allocation3 + $0x68] sm:$0xff] %v1302
          %1335 = vst [vmem:[#allocation3 + $0x70] sm:$0xff] %v1303
          %1336 = vst [vmem:[#allocation3 + $0x78] sm:$0xff] %v1304
          %1337 = vst [vmem:[#allocation3 + $0x80] sm:$0xff] %v1305
          %1338 = vst [vmem:[#allocation3 + $0x88] sm:$0xff] %v1306
          %1339 = vst [vmem:[#allocation3 + $0x90] sm:$0xff] %v1307
          %1340 = vst [vmem:[#allocation3 + $0x98] sm:$0xff] %v1308
          %1341 = vst [vmem:[#allocation3 + $0xa0] sm:$0xff] %v1309
          %1342 = vst [vmem:[#allocation3 + $0xa8] sm:$0xff] %v1310
          %1343 = vst [vmem:[#allocation3 + $0xb0] sm:$0xff] %v1311
          %1344 = vst [vmem:[#allocation3 + $0xb8] sm:$0xff] %v1312
          %1345 = vst [vmem:[#allocation3 + $0xc0] sm:$0xff] %v1313
          %1346 = vst [vmem:[#allocation3 + $0xc8] sm:$0xff] %v1314
          %1347 = vst [vmem:[#allocation3 + $0xd0] sm:$0xff] %v1315
          %1348 = vst [vmem:[#allocation3 + $0xd8] sm:$0xff] %v1316
          %1349 = vst [vmem:[#allocation3 + $0xe0] sm:$0xff] %v1317
          %1350 = vst [vmem:[#allocation3 + $0xe8] sm:$0xff] %v1318
          %1351 = vst [vmem:[#allocation3 + $0xf0] sm:$0xff] %v1319
          %1352 = vst [vmem:[#allocation3 + $0xf8] sm:$0xff] %v1320
        $region104: #{tpu_custom_call.1} parent=59 // pred_fallthru
          _
        %v1353 = vld [vmem:[%s461] sm:$0xf]
        %v1354 = vld [vmem:[%s461 + $0x4] sm:$0xf]
        %v1355 = vld [vmem:[#allocation11] sm:$0xff]
        %v1356 = vld [vmem:[#allocation11 + $0x8] sm:$0xff]
        %v1357 = vld [vmem:[#allocation11 + $0x10] sm:$0xff]
        %v1358 = vld [vmem:[#allocation11 + $0x18] sm:$0xff]
        %v1359 = vld [vmem:[#allocation11 + $0x20] sm:$0xff]
        %v1360 = vld [vmem:[#allocation11 + $0x28] sm:$0xff]
        %v1361 = vld [vmem:[#allocation11 + $0x30] sm:$0xff]
        %v1362 = vld [vmem:[#allocation11 + $0x38] sm:$0xff]
        %v1363 = vld [vmem:[#allocation12] sm:$0xf]
        %v1365 = vlaneseq
        %v1366 = vshrl.u32 %v1365, 7
        %v1367 = vsub.s32 0, %v1366
        %v1368 = vrot.slane %v1363, %v1367
        %v1369 = vlaneseq
        %v1370 = vshrl.u32 %v1369, 7
        %v1371 = vsub.s32 1, %v1370
        %v1372 = vrot.slane %v1363, %v1371
        %v1373 = vlaneseq
        %v1374 = vshrl.u32 %v1373, 7
        %v1375 = vsub.s32 2, %v1374
        %v1376 = vrot.slane %v1363, %v1375
        %v1377 = vlaneseq
        %v1378 = vshrl.u32 %v1377, 7
        %v1379 = vsub.s32 3, %v1378
        %v1380 = vrot.slane %v1363, %v1379
        %v1387 = vunpack.c.l.b16 %v1353
        %v1388 = vunpack.c.l.b16 %v1354
        %v1389 = vpack.c.b16 %v1388, %v1387
        %v1398 = vunpack.c.l.b16 %v1355
        %v1399 = vunpack.c.h.b16 %v1355
        %v1400 = vunpack.c.l.b16 %v1356
        %v1401 = vunpack.c.h.b16 %v1356
        %v1402 = vunpack.c.l.b16 %v1357
        %v1403 = vunpack.c.h.b16 %v1357
        %v1404 = vunpack.c.l.b16 %v1358
        %v1405 = vunpack.c.h.b16 %v1358
        %v1406 = vunpack.c.l.b16 %v1359
        %v1407 = vunpack.c.h.b16 %v1359
        %v1408 = vunpack.c.l.b16 %v1360
        %v1409 = vunpack.c.h.b16 %v1360
        %v1410 = vunpack.c.l.b16 %v1361
        %v1411 = vunpack.c.h.b16 %v1361
        %v1412 = vunpack.c.l.b16 %v1362
        %v1413 = vunpack.c.h.b16 %v1362
        %v1414 = vpack.c.b16 %v1402, %v1398
        %v1415 = vpack.c.b16 %v1403, %v1399
        %v1416 = vpack.c.b16 %v1404, %v1400
        %v1417 = vpack.c.b16 %v1405, %v1401
        %v1418 = vpack.c.b16 %v1410, %v1406
        %v1419 = vpack.c.b16 %v1411, %v1407
        %v1420 = vpack.c.b16 %v1412, %v1408
        %v1421 = vpack.c.b16 %v1413, %v1409
        %vm1430 = vcmask 261120
        %v1432 = vsel %vm1430, %v1389, 0
        %1434 = vmatprep.subr.bf16.mxu0 %v1415
        %1435 = vmatpush1.bf16.msra.mxu0 %v1414
        %1436 = vmatprep.subr.bf16.mxu0 %v1419
        %1437 = vmatpush1.bf16.msra.mxu0 %v1418
        %1438 = vmatprep.subr.bf16.mxu0 0
        %1439 = vmatpush1.bf16.msra.mxu0 0
        %1440 = vmatprep.subr.bf16.mxu0 0
        %1441 = vmatpush1.bf16.msra.mxu0 0
        %1442 = vmatprep.subr.bf16.mxu0 0
        %1443 = vmatpush1.bf16.msra.mxu0 0
        %1444 = vmatprep.subr.bf16.mxu0 0
        %1445 = vmatpush1.bf16.msra.mxu0 0
        %1446 = vmatprep.subr.bf16.mxu0 0
        %1447 = vmatpush1.bf16.msra.mxu0 0
        %1448 = vmatprep.subr.bf16.mxu0 0
        %1449 = vmatpush1.bf16.msra.mxu0 0
        %1450 = vmatprep.subr.bf16.mxu0 0
        %1451 = vmatpush1.bf16.msra.mxu0 0
        %1452 = vmatprep.subr.bf16.mxu0 0
        %1453 = vmatpush1.bf16.msra.mxu0 0
        %1454 = vmatprep.subr.bf16.mxu0 0
        %1455 = vmatpush1.bf16.msra.mxu0 0
        %1456 = vmatprep.subr.bf16.mxu0 0
        %1457 = vmatpush1.bf16.msra.mxu0 0
        %1458 = vmatprep.subr.bf16.mxu0 0
        %1459 = vmatpush1.bf16.msra.mxu0 0
        %1460 = vmatprep.subr.bf16.mxu0 0
        %1461 = vmatpush1.bf16.msra.mxu0 0
        %1462 = vmatprep.subr.bf16.mxu0 0
        %1463 = vmatpush1.bf16.msra.mxu0 0
        %1464 = vmatprep.subr.bf16.mxu0 0
        %1465 = vmatpush1.bf16.msra.mxu0 0
        %1466 = vmatprep.mubr.bf16.mxu0 0
        %1467 = vmatmul.mubr.bf16.gmra.mrb[0].mxu0 %v1432
        %v1468 = vpop.f32.mrb[0].mxu0
        %v1469 = vadd.f32 %v1368, %v1468
        %v1470 = vpop.f32.mrb[0].mxu0
        %v1471 = vadd.f32 %v1372, %v1470
        %v1472 = vpop.f32.mrb[0].mxu0
        %v1473 = vadd.f32 %v1368, %v1472
        %v1474 = vpop.f32.mrb[0].mxu0
        %v1475 = vadd.f32 %v1372, %v1474
        %1476 = vdwg.mxu0
        %1477 = vmatprep.subr.bf16.mxu0 %v1417
        %1478 = vmatpush1.bf16.msra.mxu0 %v1416
        %1479 = vmatprep.subr.bf16.mxu0 %v1421
        %1480 = vmatpush1.bf16.msra.mxu0 %v1420
        %1481 = vmatprep.subr.bf16.mxu0 0
        %1482 = vmatpush1.bf16.msra.mxu0 0
        %1483 = vmatprep.subr.bf16.mxu0 0
        %1484 = vmatpush1.bf16.msra.mxu0 0
        %1485 = vmatprep.subr.bf16.mxu0 0
        %1486 = vmatpush1.bf16.msra.mxu0 0
        %1487 = vmatprep.subr.bf16.mxu0 0
        %1488 = vmatpush1.bf16.msra.mxu0 0
        %1489 = vmatprep.subr.bf16.mxu0 0
        %1490 = vmatpush1.bf16.msra.mxu0 0
        %1491 = vmatprep.subr.bf16.mxu0 0
        %1492 = vmatpush1.bf16.msra.mxu0 0
        %1493 = vmatprep.subr.bf16.mxu0 0
        %1494 = vmatpush1.bf16.msra.mxu0 0
        %1495 = vmatprep.subr.bf16.mxu0 0
        %1496 = vmatpush1.bf16.msra.mxu0 0
        %1497 = vmatprep.subr.bf16.mxu0 0
        %1498 = vmatpush1.bf16.msra.mxu0 0
        %1499 = vmatprep.subr.bf16.mxu0 0
        %1500 = vmatpush1.bf16.msra.mxu0 0
        %1501 = vmatprep.subr.bf16.mxu0 0
        %1502 = vmatpush1.bf16.msra.mxu0 0
        %1503 = vmatprep.subr.bf16.mxu0 0
        %1504 = vmatpush1.bf16.msra.mxu0 0
        %1505 = vmatprep.subr.bf16.mxu0 0
        %1506 = vmatpush1.bf16.msra.mxu0 0
        %1507 = vmatprep.subr.bf16.mxu0 0
        %1508 = vmatpush1.bf16.msra.mxu0 0
        %1509 = vmatprep.mubr.bf16.mxu0 0
        %1510 = vmatmul.mubr.bf16.gmra.mrb[0].mxu0 %v1432
        %v1511 = vpop.f32.mrb[0].mxu0
        %v1512 = vadd.f32 %v1376, %v1511
        %v1513 = vpop.f32.mrb[0].mxu0
        %v1514 = vadd.f32 %v1380, %v1513
        %v1515 = vpop.f32.mrb[0].mxu0
        %v1516 = vadd.f32 %v1376, %v1515
        %v1517 = vpop.f32.mrb[0].mxu0
        %v1518 = vadd.f32 %v1380, %v1517
        %1519 = vdwg.mxu0
        %v1520 = vpack.c.bf16 %v1473, %v1469
        %v1521 = vpack.c.bf16 %v1475, %v1471
        %v1522 = vpack.c.bf16 %v1516, %v1512
        %v1523 = vpack.c.bf16 %v1518, %v1514
        %1524 = vst [vmem:[#allocation4] sm:$0xff] %v1520
        %1525 = vst [vmem:[#allocation4 + $0x8] sm:$0xff] %v1521
        %1526 = vst [vmem:[#allocation4 + $0x10] sm:$0xff] %v1522
        %1527 = vst [vmem:[#allocation4 + $0x18] sm:$0xff] %v1523
        %v1528 = vlaneseq
        %v1529 = vand.u32 %v1528, 127
        %vm1530 = vcmp.lt.s32.totalorder %v1529, 8
        %v1531 = vsel %vm1530, 0.0, -1e+30
        %v1532 = vld [vmem:[#allocation4] sm:$0xff]
        %v1533 = vld [vmem:[#allocation2] sm:$0xff]
        %v1534 = vld [vmem:[#allocation2 + $0x20] sm:$0xff]
        %v1535 = vld [vmem:[#allocation2 + $0x40] sm:$0xff]
        %v1536 = vld [vmem:[#allocation2 + $0x60] sm:$0xff]
        %v1537 = vld [vmem:[#allocation2 + $0x80] sm:$0xff]
        %v1538 = vld [vmem:[#allocation2 + $0xa0] sm:$0xff]
        %v1539 = vld [vmem:[#allocation2 + $0xc0] sm:$0xff]
        %v1540 = vld [vmem:[#allocation2 + $0xe0] sm:$0xff]
        %v1541 = vld [vmem:[#allocation3] sm:$0xff]
        %v1542 = vld [vmem:[#allocation3 + $0x20] sm:$0xff]
        %v1543 = vld [vmem:[#allocation3 + $0x40] sm:$0xff]
        %v1544 = vld [vmem:[#allocation3 + $0x60] sm:$0xff]
        %v1545 = vld [vmem:[#allocation3 + $0x80] sm:$0xff]
        %v1546 = vld [vmem:[#allocation3 + $0xa0] sm:$0xff]
        %v1547 = vld [vmem:[#allocation3 + $0xc0] sm:$0xff]
        %v1548 = vld [vmem:[#allocation3 + $0xe0] sm:$0xff]
        %1549 = vmatprep.subr.bf16.mxu0 0
        %1550 = vmatpush1.bf16.xpose.msra.mxu0 %v1533
        %1551 = vmatprep.subr.bf16.mxu0 0
        %1552 = vmatpush1.bf16.xpose.msra.mxu0 %v1534
        %1553 = vmatprep.subr.bf16.mxu0 0
        %1554 = vmatpush1.bf16.xpose.msra.mxu0 %v1535
        %1555 = vmatprep.subr.bf16.mxu0 0
        %1556 = vmatpush1.bf16.xpose.msra.mxu0 %v1536
        %1557 = vmatprep.subr.bf16.mxu0 0
        %1558 = vmatpush1.bf16.xpose.msra.mxu0 %v1537
        %1559 = vmatprep.subr.bf16.mxu0 0
        %1560 = vmatpush1.bf16.xpose.msra.mxu0 %v1538
        %1561 = vmatprep.subr.bf16.mxu0 0
        %1562 = vmatpush1.bf16.xpose.msra.mxu0 %v1539
        %1563 = vmatprep.subr.bf16.mxu0 0
        %1564 = vmatpush1.bf16.xpose.msra.mxu0 %v1540
        %1565 = vmatprep.subr.bf16.mxu0 0
        %1566 = vmatpush1.bf16.xpose.msra.mxu0 0
        %1567 = vmatprep.subr.bf16.mxu0 0
        %1568 = vmatpush1.bf16.xpose.msra.mxu0 0
        %1569 = vmatprep.subr.bf16.mxu0 0
        %1570 = vmatpush1.bf16.xpose.msra.mxu0 0
        %1571 = vmatprep.subr.bf16.mxu0 0
        %1572 = vmatpush1.bf16.xpose.msra.mxu0 0
        %1573 = vmatprep.subr.bf16.mxu0 0
        %1574 = vmatpush1.bf16.xpose.msra.mxu0 0
        %1575 = vmatprep.subr.bf16.mxu0 0
        %1576 = vmatpush1.bf16.xpose.msra.mxu0 0
        %1577 = vmatprep.subr.bf16.mxu0 0
        %1578 = vmatpush1.bf16.xpose.msra.mxu0 0
        %1579 = vmatprep.subr.bf16.mxu0 0
        %1580 = vmatpush1.bf16.xpose.msra.mxu0 0
        %1581 = vmatprep.mubr.bf16.mxu0 0
        %1582 = vmatmul.mubr.bf16.gmra.mrb[0].mxu0 %v1532
        %v1583 = vpop.f32.mrb[0].mxu0
        %v1584 = vadd.f32 %v1531, %v1583
        %v1585 = vpop.f32.mrb[0].mxu0
        %v1586 = vpop.f32.mrb[0].mxu0
        %v1587 = vadd.f32 %v1531, %v1586
        %v1588 = vpop.f32.mrb[0].mxu0
        %1589 = vdwg.mxu0
        %1590 = vmax.xlane.f32.xlu0 %v1584
        %v1591 = vpop.xlane.xlu0 %1590
        %1592 = vmax.xlane.f32.xlu0 %v1587
        %v1593 = vpop.xlane.xlu0 %1592
        %v1594 = vsub.f32 %v1584, %v1591
        %v1595 = vsub.f32 %v1587, %v1593
        %v1596 = vmul.f32 %v1594, 1.442695
        %v1597 = vpow.pop %v1596
        %v1598 = vmul.f32 %v1595, 1.442695
        %v1599 = vpow.pop %v1598
        %1600 = vadd.xlane.f32.xlu0 %v1597
        %v1601 = vpop.xlane.xlu0 %1600
        %1602 = vadd.xlane.f32.xlu0 %v1599
        %v1603 = vpop.xlane.xlu0 %1602
        %v1604 = vpack.c.bf16 %v1599, %v1597
        %1605 = vmatprep.subr.bf16.mxu0 0
        %1606 = vmatpush1.bf16.msra.mxu0 %v1541
        %1607 = vmatprep.subr.bf16.mxu0 0
        %1608 = vmatpush1.bf16.msra.mxu0 %v1542
        %1609 = vmatprep.subr.bf16.mxu0 0
        %1610 = vmatpush1.bf16.msra.mxu0 %v1543
        %1611 = vmatprep.subr.bf16.mxu0 0
        %1612 = vmatpush1.bf16.msra.mxu0 %v1544
        %1613 = vmatprep.subr.bf16.mxu0 0
        %1614 = vmatpush1.bf16.msra.mxu0 %v1545
        %1615 = vmatprep.subr.bf16.mxu0 0
        %1616 = vmatpush1.bf16.msra.mxu0 %v1546
        %1617 = vmatprep.subr.bf16.mxu0 0
        %1618 = vmatpush1.bf16.msra.mxu0 %v1547
        %1619 = vmatprep.subr.bf16.mxu0 0
        %1620 = vmatpush1.bf16.msra.mxu0 %v1548
        %1621 = vmatprep.subr.bf16.mxu0 0
        %1622 = vmatpush1.bf16.msra.mxu0 0
        %1623 = vmatprep.subr.bf16.mxu0 0
        %1624 = vmatpush1.bf16.msra.mxu0 0
        %1625 = vmatprep.subr.bf16.mxu0 0
        %1626 = vmatpush1.bf16.msra.mxu0 0
        %1627 = vmatprep.subr.bf16.mxu0 0
        %1628 = vmatpush1.bf16.msra.mxu0 0
        %1629 = vmatprep.subr.bf16.mxu0 0
        %1630 = vmatpush1.bf16.msra.mxu0 0
        %1631 = vmatprep.subr.bf16.mxu0 0
        %1632 = vmatpush1.bf16.msra.mxu0 0
        %1633 = vmatprep.subr.bf16.mxu0 0
        %1634 = vmatpush1.bf16.msra.mxu0 0
        %1635 = vmatprep.subr.bf16.mxu0 0
        %1636 = vmatpush1.bf16.msra.mxu0 0
        %1637 = vmatprep.mubr.bf16.mxu0 0
        %1638 = vmatmul.mubr.bf16.gmra.mrb[0].mxu0 %v1604
        %v1639 = vpop.f32.mrb[0].mxu0
        %v1640 = vadd.f32 0.0, %v1639
        %v1641 = vpop.f32.mrb[0].mxu0
        %v1642 = vpop.f32.mrb[0].mxu0
        %v1643 = vadd.f32 0.0, %v1642
        %v1644 = vpop.f32.mrb[0].mxu0
        %1645 = vdwg.mxu0
        %v1646 = vrcp.pop %v1601
        %v1647 = vrcp.pop %v1603
        %v1648 = vmul.f32 %v1640, %v1646
        %v1649 = vmul.f32 %v1643, %v1647
        %v1650 = vpack.c.bf16 %v1649, %v1648
        %1651 = vst [vmem:[#allocation5] sm:$0xff] %v1650
        %v1652 = vld [vmem:[#allocation4 + $0x8] sm:$0xff]
        %v1653 = vld [vmem:[#allocation2 + $0x8] sm:$0xff]
        %v1654 = vld [vmem:[#allocation2 + $0x28] sm:$0xff]
        %v1655 = vld [vmem:[#allocation2 + $0x48] sm:$0xff]
        %v1656 = vld [vmem:[#allocation2 + $0x68] sm:$0xff]
        %v1657 = vld [vmem:[#allocation2 + $0x88] sm:$0xff]
        %v1658 = vld [vmem:[#allocation2 + $0xa8] sm:$0xff]
        %v1659 = vld [vmem:[#allocation2 + $0xc8] sm:$0xff]
        %v1660 = vld [vmem:[#allocation2 + $0xe8] sm:$0xff]
        %v1661 = vld [vmem:[#allocation3 + $0x8] sm:$0xff]
        %v1662 = vld [vmem:[#allocation3 + $0x28] sm:$0xff]
        %v1663 = vld [vmem:[#allocation3 + $0x48] sm:$0xff]
        %v1664 = vld [vmem:[#allocation3 + $0x68] sm:$0xff]
        %v1665 = vld [vmem:[#allocation3 + $0x88] sm:$0xff]
        %v1666 = vld [vmem:[#allocation3 + $0xa8] sm:$0xff]
        %v1667 = vld [vmem:[#allocation3 + $0xc8] sm:$0xff]
        %v1668 = vld [vmem:[#allocation3 + $0xe8] sm:$0xff]
        %1669 = vmatprep.subr.bf16.mxu0 0
        %1670 = vmatpush1.bf16.xpose.msra.mxu0 %v1653
        %1671 = vmatprep.subr.bf16.mxu0 0
        %1672 = vmatpush1.bf16.xpose.msra.mxu0 %v1654
        %1673 = vmatprep.subr.bf16.mxu0 0
        %1674 = vmatpush1.bf16.xpose.msra.mxu0 %v1655
        %1675 = vmatprep.subr.bf16.mxu0 0
        %1676 = vmatpush1.bf16.xpose.msra.mxu0 %v1656
        %1677 = vmatprep.subr.bf16.mxu0 0
        %1678 = vmatpush1.bf16.xpose.msra.mxu0 %v1657
        %1679 = vmatprep.subr.bf16.mxu0 0
        %1680 = vmatpush1.bf16.xpose.msra.mxu0 %v1658
        %1681 = vmatprep.subr.bf16.mxu0 0
        %1682 = vmatpush1.bf16.xpose.msra.mxu0 %v1659
        %1683 = vmatprep.subr.bf16.mxu0 0
        %1684 = vmatpush1.bf16.xpose.msra.mxu0 %v1660
        %1685 = vmatprep.subr.bf16.mxu0 0
        %1686 = vmatpush1.bf16.xpose.msra.mxu0 0
        %1687 = vmatprep.subr.bf16.mxu0 0
        %1688 = vmatpush1.bf16.xpose.msra.mxu0 0
        %1689 = vmatprep.subr.bf16.mxu0 0
        %1690 = vmatpush1.bf16.xpose.msra.mxu0 0
        %1691 = vmatprep.subr.bf16.mxu0 0
        %1692 = vmatpush1.bf16.xpose.msra.mxu0 0
        %1693 = vmatprep.subr.bf16.mxu0 0
        %1694 = vmatpush1.bf16.xpose.msra.mxu0 0
        %1695 = vmatprep.subr.bf16.mxu0 0
        %1696 = vmatpush1.bf16.xpose.msra.mxu0 0
        %1697 = vmatprep.subr.bf16.mxu0 0
        %1698 = vmatpush1.bf16.xpose.msra.mxu0 0
        %1699 = vmatprep.subr.bf16.mxu0 0
        %1700 = vmatpush1.bf16.xpose.msra.mxu0 0
        %1701 = vmatprep.mubr.bf16.mxu0 0
        %1702 = vmatmul.mubr.bf16.gmra.mrb[0].mxu0 %v1652
        %v1703 = vpop.f32.mrb[0].mxu0
        %v1704 = vadd.f32 %v1531, %v1703
        %v1705 = vpop.f32.mrb[0].mxu0
        %v1706 = vpop.f32.mrb[0].mxu0
        %v1707 = vadd.f32 %v1531, %v1706
        %v1708 = vpop.f32.mrb[0].mxu0
        %1709 = vdwg.mxu0
        %1710 = vmax.xlane.f32.xlu0 %v1704
        %v1711 = vpop.xlane.xlu0 %1710
        %1712 = vmax.xlane.f32.xlu0 %v1707
        %v1713 = vpop.xlane.xlu0 %1712
        %v1714 = vsub.f32 %v1704, %v1711
        %v1715 = vsub.f32 %v1707, %v1713
        %v1716 = vmul.f32 %v1714, 1.442695
        %v1717 = vpow.pop %v1716
        %v1718 = vmul.f32 %v1715, 1.442695
        %v1719 = vpow.pop %v1718
        %1720 = vadd.xlane.f32.xlu0 %v1717
        %v1721 = vpop.xlane.xlu0 %1720
        %1722 = vadd.xlane.f32.xlu0 %v1719
        %v1723 = vpop.xlane.xlu0 %1722
        %v1724 = vpack.c.bf16 %v1719, %v1717
        %1725 = vmatprep.subr.bf16.mxu0 0
        %1726 = vmatpush1.bf16.msra.mxu0 %v1661
        %1727 = vmatprep.subr.bf16.mxu0 0
        %1728 = vmatpush1.bf16.msra.mxu0 %v1662
        %1729 = vmatprep.subr.bf16.mxu0 0
        %1730 = vmatpush1.bf16.msra.mxu0 %v1663
        %1731 = vmatprep.subr.bf16.mxu0 0
        %1732 = vmatpush1.bf16.msra.mxu0 %v1664
        %1733 = vmatprep.subr.bf16.mxu0 0
        %1734 = vmatpush1.bf16.msra.mxu0 %v1665
        %1735 = vmatprep.subr.bf16.mxu0 0
        %1736 = vmatpush1.bf16.msra.mxu0 %v1666
        %1737 = vmatprep.subr.bf16.mxu0 0
        %1738 = vmatpush1.bf16.msra.mxu0 %v1667
        %1739 = vmatprep.subr.bf16.mxu0 0
        %1740 = vmatpush1.bf16.msra.mxu0 %v1668
        %1741 = vmatprep.subr.bf16.mxu0 0
        %1742 = vmatpush1.bf16.msra.mxu0 0
        %1743 = vmatprep.subr.bf16.mxu0 0
        %1744 = vmatpush1.bf16.msra.mxu0 0
        %1745 = vmatprep.subr.bf16.mxu0 0
        %1746 = vmatpush1.bf16.msra.mxu0 0
        %1747 = vmatprep.subr.bf16.mxu0 0
        %1748 = vmatpush1.bf16.msra.mxu0 0
        %1749 = vmatprep.subr.bf16.mxu0 0
        %1750 = vmatpush1.bf16.msra.mxu0 0
        %1751 = vmatprep.subr.bf16.mxu0 0
        %1752 = vmatpush1.bf16.msra.mxu0 0
        %1753 = vmatprep.subr.bf16.mxu0 0
        %1754 = vmatpush1.bf16.msra.mxu0 0
        %1755 = vmatprep.subr.bf16.mxu0 0
        %1756 = vmatpush1.bf16.msra.mxu0 0
        %1757 = vmatprep.mubr.bf16.mxu0 0
        %1758 = vmatmul.mubr.bf16.gmra.mrb[0].mxu0 %v1724
        %v1759 = vpop.f32.mrb[0].mxu0
        %v1760 = vadd.f32 0.0, %v1759
        %v1761 = vpop.f32.mrb[0].mxu0
        %v1762 = vpop.f32.mrb[0].mxu0
        %v1763 = vadd.f32 0.0, %v1762
        %v1764 = vpop.f32.mrb[0].mxu0
        %1765 = vdwg.mxu0
        %v1766 = vrcp.pop %v1721
        %v1767 = vrcp.pop %v1723
        %v1768 = vmul.f32 %v1760, %v1766
        %v1769 = vmul.f32 %v1763, %v1767
        %v1770 = vpack.c.bf16 %v1769, %v1768
        %1771 = vst [vmem:[#allocation5 + $0x8] sm:$0xff] %v1770
        %v1772 = vld [vmem:[#allocation4 + $0x10] sm:$0xff]
        %v1773 = vld [vmem:[#allocation2 + $0x10] sm:$0xff]
        %v1774 = vld [vmem:[#allocation2 + $0x30] sm:$0xff]
        %v1775 = vld [vmem:[#allocation2 + $0x50] sm:$0xff]
        %v1776 = vld [vmem:[#allocation2 + $0x70] sm:$0xff]
        %v1777 = vld [vmem:[#allocation2 + $0x90] sm:$0xff]
        %v1778 = vld [vmem:[#allocation2 + $0xb0] sm:$0xff]
        %v1779 = vld [vmem:[#allocation2 + $0xd0] sm:$0xff]
        %v1780 = vld [vmem:[#allocation2 + $0xf0] sm:$0xff]
        %v1781 = vld [vmem:[#allocation3 + $0x10] sm:$0xff]
        %v1782 = vld [vmem:[#allocation3 + $0x30] sm:$0xff]
        %v1783 = vld [vmem:[#allocation3 + $0x50] sm:$0xff]
        %v1784 = vld [vmem:[#allocation3 + $0x70] sm:$0xff]
        %v1785 = vld [vmem:[#allocation3 + $0x90] sm:$0xff]
        %v1786 = vld [vmem:[#allocation3 + $0xb0] sm:$0xff]
        %v1787 = vld [vmem:[#allocation3 + $0xd0] sm:$0xff]
        %v1788 = vld [vmem:[#allocation3 + $0xf0] sm:$0xff]
        %1789 = vmatprep.subr.bf16.mxu0 0
        %1790 = vmatpush1.bf16.xpose.msra.mxu0 %v1773
        %1791 = vmatprep.subr.bf16.mxu0 0
        %1792 = vmatpush1.bf16.xpose.msra.mxu0 %v1774
        %1793 = vmatprep.subr.bf16.mxu0 0
        %1794 = vmatpush1.bf16.xpose.msra.mxu0 %v1775
        %1795 = vmatprep.subr.bf16.mxu0 0
        %1796 = vmatpush1.bf16.xpose.msra.mxu0 %v1776
        %1797 = vmatprep.subr.bf16.mxu0 0
        %1798 = vmatpush1.bf16.xpose.msra.mxu0 %v1777
        %1799 = vmatprep.subr.bf16.mxu0 0
        %1800 = vmatpush1.bf16.xpose.msra.mxu0 %v1778
        %1801 = vmatprep.subr.bf16.mxu0 0
        %1802 = vmatpush1.bf16.xpose.msra.mxu0 %v1779
        %1803 = vmatprep.subr.bf16.mxu0 0
        %1804 = vmatpush1.bf16.xpose.msra.mxu0 %v1780
        %1805 = vmatprep.subr.bf16.mxu0 0
        %1806 = vmatpush1.bf16.xpose.msra.mxu0 0
        %1807 = vmatprep.subr.bf16.mxu0 0
        %1808 = vmatpush1.bf16.xpose.msra.mxu0 0
        %1809 = vmatprep.subr.bf16.mxu0 0
        %1810 = vmatpush1.bf16.xpose.msra.mxu0 0
        %1811 = vmatprep.subr.bf16.mxu0 0
        %1812 = vmatpush1.bf16.xpose.msra.mxu0 0
        %1813 = vmatprep.subr.bf16.mxu0 0
        %1814 = vmatpush1.bf16.xpose.msra.mxu0 0
        %1815 = vmatprep.subr.bf16.mxu0 0
        %1816 = vmatpush1.bf16.xpose.msra.mxu0 0
        %1817 = vmatprep.subr.bf16.mxu0 0
        %1818 = vmatpush1.bf16.xpose.msra.mxu0 0
        %1819 = vmatprep.subr.bf16.mxu0 0
        %1820 = vmatpush1.bf16.xpose.msra.mxu0 0
        %1821 = vmatprep.mubr.bf16.mxu0 0
        %1822 = vmatmul.mubr.bf16.gmra.mrb[0].mxu0 %v1772
        %v1823 = vpop.f32.mrb[0].mxu0
        %v1824 = vadd.f32 %v1531, %v1823
        %v1825 = vpop.f32.mrb[0].mxu0
        %v1826 = vpop.f32.mrb[0].mxu0
        %v1827 = vadd.f32 %v1531, %v1826
        %v1828 = vpop.f32.mrb[0].mxu0
        %1829 = vdwg.mxu0
        %1830 = vmax.xlane.f32.xlu0 %v1824
        %v1831 = vpop.xlane.xlu0 %1830
        %1832 = vmax.xlane.f32.xlu0 %v1827
        %v1833 = vpop.xlane.xlu0 %1832
        %v1834 = vsub.f32 %v1824, %v1831
        %v1835 = vsub.f32 %v1827, %v1833
        %v1836 = vmul.f32 %v1834, 1.442695
        %v1837 = vpow.pop %v1836
        %v1838 = vmul.f32 %v1835, 1.442695
        %v1839 = vpow.pop %v1838
        %1840 = vadd.xlane.f32.xlu0 %v1837
        %v1841 = vpop.xlane.xlu0 %1840
        %1842 = vadd.xlane.f32.xlu0 %v1839
        %v1843 = vpop.xlane.xlu0 %1842
        %v1844 = vpack.c.bf16 %v1839, %v1837
        %1845 = vmatprep.subr.bf16.mxu0 0
        %1846 = vmatpush1.bf16.msra.mxu0 %v1781
        %1847 = vmatprep.subr.bf16.mxu0 0
        %1848 = vmatpush1.bf16.msra.mxu0 %v1782
        %1849 = vmatprep.subr.bf16.mxu0 0
        %1850 = vmatpush1.bf16.msra.mxu0 %v1783
        %1851 = vmatprep.subr.bf16.mxu0 0
        %1852 = vmatpush1.bf16.msra.mxu0 %v1784
        %1853 = vmatprep.subr.bf16.mxu0 0
        %1854 = vmatpush1.bf16.msra.mxu0 %v1785
        %1855 = vmatprep.subr.bf16.mxu0 0
        %1856 = vmatpush1.bf16.msra.mxu0 %v1786
        %1857 = vmatprep.subr.bf16.mxu0 0
        %1858 = vmatpush1.bf16.msra.mxu0 %v1787
        %1859 = vmatprep.subr.bf16.mxu0 0
        %1860 = vmatpush1.bf16.msra.mxu0 %v1788
        %1861 = vmatprep.subr.bf16.mxu0 0
        %1862 = vmatpush1.bf16.msra.mxu0 0
        %1863 = vmatprep.subr.bf16.mxu0 0
        %1864 = vmatpush1.bf16.msra.mxu0 0
        %1865 = vmatprep.subr.bf16.mxu0 0
        %1866 = vmatpush1.bf16.msra.mxu0 0
        %1867 = vmatprep.subr.bf16.mxu0 0
        %1868 = vmatpush1.bf16.msra.mxu0 0
        %1869 = vmatprep.subr.bf16.mxu0 0
        %1870 = vmatpush1.bf16.msra.mxu0 0
        %1871 = vmatprep.subr.bf16.mxu0 0
        %1872 = vmatpush1.bf16.msra.mxu0 0
        %1873 = vmatprep.subr.bf16.mxu0 0
        %1874 = vmatpush1.bf16.msra.mxu0 0
        %1875 = vmatprep.subr.bf16.mxu0 0
        %1876 = vmatpush1.bf16.msra.mxu0 0
        %1877 = vmatprep.mubr.bf16.mxu0 0
        %1878 = vmatmul.mubr.bf16.gmra.mrb[0].mxu0 %v1844
        %v1879 = vpop.f32.mrb[0].mxu0
        %v1880 = vadd.f32 0.0, %v1879
        %v1881 = vpop.f32.mrb[0].mxu0
        %v1882 = vpop.f32.mrb[0].mxu0
        %v1883 = vadd.f32 0.0, %v1882
        %v1884 = vpop.f32.mrb[0].mxu0
        %1885 = vdwg.mxu0
        %v1886 = vrcp.pop %v1841
        %v1887 = vrcp.pop %v1843
        %v1888 = vmul.f32 %v1880, %v1886
        %v1889 = vmul.f32 %v1883, %v1887
        %v1890 = vpack.c.bf16 %v1889, %v1888
        %1891 = vst [vmem:[#allocation5 + $0x10] sm:$0xff] %v1890
        %v1892 = vld [vmem:[#allocation4 + $0x18] sm:$0xff]
        %v1893 = vld [vmem:[#allocation2 + $0x18] sm:$0xff]
        %v1894 = vld [vmem:[#allocation2 + $0x38] sm:$0xff]
        %v1895 = vld [vmem:[#allocation2 + $0x58] sm:$0xff]
        %v1896 = vld [vmem:[#allocation2 + $0x78] sm:$0xff]
        %v1897 = vld [vmem:[#allocation2 + $0x98] sm:$0xff]
        %v1898 = vld [vmem:[#allocation2 + $0xb8] sm:$0xff]
        %v1899 = vld [vmem:[#allocation2 + $0xd8] sm:$0xff]
        %v1900 = vld [vmem:[#allocation2 + $0xf8] sm:$0xff]
        %v1901 = vld [vmem:[#allocation3 + $0x18] sm:$0xff]
        %v1902 = vld [vmem:[#allocation3 + $0x38] sm:$0xff]
        %v1903 = vld [vmem:[#allocation3 + $0x58] sm:$0xff]
        %v1904 = vld [vmem:[#allocation3 + $0x78] sm:$0xff]
        %v1905 = vld [vmem:[#allocation3 + $0x98] sm:$0xff]
        %v1906 = vld [vmem:[#allocation3 + $0xb8] sm:$0xff]
        %v1907 = vld [vmem:[#allocation3 + $0xd8] sm:$0xff]
        %v1908 = vld [vmem:[#allocation3 + $0xf8] sm:$0xff]
        %1909 = vmatprep.subr.bf16.mxu0 0
        %1910 = vmatpush1.bf16.xpose.msra.mxu0 %v1893
        %1911 = vmatprep.subr.bf16.mxu0 0
        %1912 = vmatpush1.bf16.xpose.msra.mxu0 %v1894
        %1913 = vmatprep.subr.bf16.mxu0 0
        %1914 = vmatpush1.bf16.xpose.msra.mxu0 %v1895
        %1915 = vmatprep.subr.bf16.mxu0 0
        %1916 = vmatpush1.bf16.xpose.msra.mxu0 %v1896
        %1917 = vmatprep.subr.bf16.mxu0 0
        %1918 = vmatpush1.bf16.xpose.msra.mxu0 %v1897
        %1919 = vmatprep.subr.bf16.mxu0 0
        %1920 = vmatpush1.bf16.xpose.msra.mxu0 %v1898
        %1921 = vmatprep.subr.bf16.mxu0 0
        %1922 = vmatpush1.bf16.xpose.msra.mxu0 %v1899
        %1923 = vmatprep.subr.bf16.mxu0 0
        %1924 = vmatpush1.bf16.xpose.msra.mxu0 %v1900
        %1925 = vmatprep.subr.bf16.mxu0 0
        %1926 = vmatpush1.bf16.xpose.msra.mxu0 0
        %1927 = vmatprep.subr.bf16.mxu0 0
        %1928 = vmatpush1.bf16.xpose.msra.mxu0 0
        %1929 = vmatprep.subr.bf16.mxu0 0
        %1930 = vmatpush1.bf16.xpose.msra.mxu0 0
        %1931 = vmatprep.subr.bf16.mxu0 0
        %1932 = vmatpush1.bf16.xpose.msra.mxu0 0
        %1933 = vmatprep.subr.bf16.mxu0 0
        %1934 = vmatpush1.bf16.xpose.msra.mxu0 0
        %1935 = vmatprep.subr.bf16.mxu0 0
        %1936 = vmatpush1.bf16.xpose.msra.mxu0 0
        %1937 = vmatprep.subr.bf16.mxu0 0
        %1938 = vmatpush1.bf16.xpose.msra.mxu0 0
        %1939 = vmatprep.subr.bf16.mxu0 0
        %1940 = vmatpush1.bf16.xpose.msra.mxu0 0
        %1941 = vmatprep.mubr.bf16.mxu0 0
        %1942 = vmatmul.mubr.bf16.gmra.mrb[0].mxu0 %v1892
        %v1943 = vpop.f32.mrb[0].mxu0
        %v1944 = vadd.f32 %v1531, %v1943
        %v1945 = vpop.f32.mrb[0].mxu0
        %v1946 = vpop.f32.mrb[0].mxu0
        %v1947 = vadd.f32 %v1531, %v1946
        %v1948 = vpop.f32.mrb[0].mxu0
        %1949 = vdwg.mxu0
        %1950 = vmax.xlane.f32.xlu0 %v1944
        %v1951 = vpop.xlane.xlu0 %1950
        %1952 = vmax.xlane.f32.xlu0 %v1947
        %v1953 = vpop.xlane.xlu0 %1952
        %v1954 = vsub.f32 %v1944, %v1951
        %v1955 = vsub.f32 %v1947, %v1953
        %v1956 = vmul.f32 %v1954, 1.442695
        %v1957 = vpow.pop %v1956
        %v1958 = vmul.f32 %v1955, 1.442695
        %v1959 = vpow.pop %v1958
        %1960 = vadd.xlane.f32.xlu0 %v1957
        %v1961 = vpop.xlane.xlu0 %1960
        %1962 = vadd.xlane.f32.xlu0 %v1959
        %v1963 = vpop.xlane.xlu0 %1962
        %v1964 = vpack.c.bf16 %v1959, %v1957
        %1965 = vmatprep.subr.bf16.mxu0 0
        %1966 = vmatpush1.bf16.msra.mxu0 %v1901
        %1967 = vmatprep.subr.bf16.mxu0 0
        %1968 = vmatpush1.bf16.msra.mxu0 %v1902
        %1969 = vmatprep.subr.bf16.mxu0 0
        %1970 = vmatpush1.bf16.msra.mxu0 %v1903
        %1971 = vmatprep.subr.bf16.mxu0 0
        %1972 = vmatpush1.bf16.msra.mxu0 %v1904
        %1973 = vmatprep.subr.bf16.mxu0 0
        %1974 = vmatpush1.bf16.msra.mxu0 %v1905
        %1975 = vmatprep.subr.bf16.mxu0 0
        %1976 = vmatpush1.bf16.msra.mxu0 %v1906
        %1977 = vmatprep.subr.bf16.mxu0 0
        %1978 = vmatpush1.bf16.msra.mxu0 %v1907
        %1979 = vmatprep.subr.bf16.mxu0 0
        %1980 = vmatpush1.bf16.msra.mxu0 %v1908
        %1981 = vmatprep.subr.bf16.mxu0 0
        %1982 = vmatpush1.bf16.msra.mxu0 0
        %1983 = vmatprep.subr.bf16.mxu0 0
        %1984 = vmatpush1.bf16.msra.mxu0 0
        %1985 = vmatprep.subr.bf16.mxu0 0
        %1986 = vmatpush1.bf16.msra.mxu0 0
        %1987 = vmatprep.subr.bf16.mxu0 0
        %1988 = vmatpush1.bf16.msra.mxu0 0
        %1989 = vmatprep.subr.bf16.mxu0 0
        %1990 = vmatpush1.bf16.msra.mxu0 0
        %1991 = vmatprep.subr.bf16.mxu0 0
        %1992 = vmatpush1.bf16.msra.mxu0 0
        %1993 = vmatprep.subr.bf16.mxu0 0
        %1994 = vmatpush1.bf16.msra.mxu0 0
        %1995 = vmatprep.subr.bf16.mxu0 0
        %1996 = vmatpush1.bf16.msra.mxu0 0
        %1997 = vmatprep.mubr.bf16.mxu0 0
        %1998 = vmatmul.mubr.bf16.gmra.mrb[0].mxu0 %v1964
        %v1999 = vpop.f32.mrb[0].mxu0
        %v2000 = vadd.f32 0.0, %v1999
        %v2001 = vpop.f32.mrb[0].mxu0
        %v2002 = vpop.f32.mrb[0].mxu0
        %v2003 = vadd.f32 0.0, %v2002
        %v2004 = vpop.f32.mrb[0].mxu0
        %2005 = vdwg.mxu0
        %v2006 = vrcp.pop %v1961
        %v2007 = vrcp.pop %v1963
        %v2008 = vmul.f32 %v2000, %v2006
        %v2009 = vmul.f32 %v2003, %v2007
        %v2010 = vpack.c.bf16 %v2009, %v2008
        %2011 = vst [vmem:[#allocation5 + $0x18] sm:$0xff] %v2010
        %v2012 = vld [vmem:[#allocation5] sm:$0xff]
        %v2013 = vld [vmem:[#allocation5 + $0x8] sm:$0xff]
        %v2014 = vld [vmem:[#allocation5 + $0x10] sm:$0xff]
        %v2015 = vld [vmem:[#allocation5 + $0x18] sm:$0xff]
        %v2016 = vld [vmem:[#allocation20] sm:$0xf]
        %v2017 = vld [vmem:[#allocation20 + $0x4] sm:$0xf]
        %v2018 = vld [vmem:[#allocation20 + $0x8] sm:$0xf]
        %v2019 = vld [vmem:[#allocation20 + $0xc] sm:$0xf]
        %v2020 = vld [vmem:[#allocation20 + $0x10] sm:$0xf]
        %v2021 = vld [vmem:[#allocation20 + $0x14] sm:$0xf]
        %v2022 = vld [vmem:[#allocation20 + $0x18] sm:$0xf]
        %v2023 = vld [vmem:[#allocation20 + $0x1c] sm:$0xf]
        %v2024 = vld [vmem:[#allocation20 + $0x20] sm:$0xf]
        %v2025 = vld [vmem:[#allocation20 + $0x24] sm:$0xf]
        %v2026 = vld [vmem:[#allocation20 + $0x28] sm:$0xf]
        %v2027 = vld [vmem:[#allocation20 + $0x2c] sm:$0xf]
        %v2028 = vld [vmem:[#allocation20 + $0x30] sm:$0xf]
        %v2029 = vld [vmem:[#allocation20 + $0x34] sm:$0xf]
        %v2030 = vld [vmem:[#allocation20 + $0x38] sm:$0xf]
        %v2031 = vld [vmem:[#allocation20 + $0x3c] sm:$0xf]
        %v2032 = vld [vmem:[#allocation20 + $0x40] sm:$0xf]
        %v2033 = vld [vmem:[#allocation20 + $0x44] sm:$0xf]
        %v2034 = vld [vmem:[#allocation20 + $0x48] sm:$0xf]
        %v2035 = vld [vmem:[#allocation20 + $0x4c] sm:$0xf]
        %v2036 = vld [vmem:[#allocation20 + $0x50] sm:$0xf]
        %v2037 = vld [vmem:[#allocation20 + $0x54] sm:$0xf]
        %v2038 = vld [vmem:[#allocation20 + $0x58] sm:$0xf]
        %v2039 = vld [vmem:[#allocation20 + $0x5c] sm:$0xf]
        %v2040 = vld [vmem:[#allocation20 + $0x60] sm:$0xf]
        %v2041 = vld [vmem:[#allocation20 + $0x64] sm:$0xf]
        %v2042 = vld [vmem:[#allocation20 + $0x68] sm:$0xf]
        %v2043 = vld [vmem:[#allocation20 + $0x6c] sm:$0xf]
        %v2044 = vld [vmem:[#allocation20 + $0x70] sm:$0xf]
        %v2045 = vld [vmem:[#allocation20 + $0x74] sm:$0xf]
        %v2046 = vld [vmem:[#allocation20 + $0x78] sm:$0xf]
        %v2047 = vld [vmem:[#allocation20 + $0x7c] sm:$0xf]
        %v2048 = vld [vmem:[#allocation20 + $0x80] sm:$0xf]
        %v2049 = vld [vmem:[#allocation20 + $0x84] sm:$0xf]
        %v2050 = vld [vmem:[#allocation20 + $0x88] sm:$0xf]
        %v2051 = vld [vmem:[#allocation20 + $0x8c] sm:$0xf]
        %v2052 = vld [vmem:[#allocation20 + $0x90] sm:$0xf]
        %v2053 = vld [vmem:[#allocation20 + $0x94] sm:$0xf]
        %v2054 = vld [vmem:[#allocation20 + $0x98] sm:$0xf]
        %v2055 = vld [vmem:[#allocation20 + $0x9c] sm:$0xf]
        %v2056 = vld [vmem:[#allocation20 + $0xa0] sm:$0xf]
        %v2057 = vld [vmem:[#allocation20 + $0xa4] sm:$0xf]
        %v2058 = vld [vmem:[#allocation20 + $0xa8] sm:$0xf]
        %v2059 = vld [vmem:[#allocation20 + $0xac] sm:$0xf]
        %v2060 = vld [vmem:[#allocation20 + $0xb0] sm:$0xf]
        %v2061 = vld [vmem:[#allocation20 + $0xb4] sm:$0xf]
        %v2062 = vld [vmem:[#allocation20 + $0xb8] sm:$0xf]
        %v2063 = vld [vmem:[#allocation20 + $0xbc] sm:$0xf]
        %v2064 = vld [vmem:[#allocation20 + $0xc0] sm:$0xf]
        %v2065 = vld [vmem:[#allocation20 + $0xc4] sm:$0xf]
        %v2066 = vld [vmem:[#allocation20 + $0xc8] sm:$0xf]
        %v2067 = vld [vmem:[#allocation20 + $0xcc] sm:$0xf]
        %v2068 = vld [vmem:[#allocation20 + $0xd0] sm:$0xf]
        %v2069 = vld [vmem:[#allocation20 + $0xd4] sm:$0xf]
        %v2070 = vld [vmem:[#allocation20 + $0xd8] sm:$0xf]
        %v2071 = vld [vmem:[#allocation20 + $0xdc] sm:$0xf]
        %v2072 = vld [vmem:[#allocation20 + $0xe0] sm:$0xf]
        %v2073 = vld [vmem:[#allocation20 + $0xe4] sm:$0xf]
        %v2074 = vld [vmem:[#allocation20 + $0xe8] sm:$0xf]
        %v2075 = vld [vmem:[#allocation20 + $0xec] sm:$0xf]
        %v2076 = vld [vmem:[#allocation20 + $0xf0] sm:$0xf]
        %v2077 = vld [vmem:[#allocation20 + $0xf4] sm:$0xf]
        %v2078 = vld [vmem:[#allocation20 + $0xf8] sm:$0xf]
        %v2079 = vld [vmem:[#allocation20 + $0xfc] sm:$0xf]
        %v2080 = vld [vmem:[#allocation21] sm:$0x1]
        %v2082 = vlaneseq
        %v2083 = vshrl.u32 %v2082, 7
        %v2084 = vsub.s32 0, %v2083
        %v2085 = vrot.slane %v2080, %v2084
        %v2151 = vunpack.c.l.b16 %v2016
        %v2152 = vunpack.c.l.b16 %v2017
        %v2153 = vunpack.c.l.b16 %v2018
        %v2154 = vunpack.c.l.b16 %v2019
        %v2155 = vunpack.c.l.b16 %v2020
        %v2156 = vunpack.c.l.b16 %v2021
        %v2157 = vunpack.c.l.b16 %v2022
        %v2158 = vunpack.c.l.b16 %v2023
        %v2159 = vunpack.c.l.b16 %v2024
        %v2160 = vunpack.c.l.b16 %v2025
        %v2161 = vunpack.c.l.b16 %v2026
        %v2162 = vunpack.c.l.b16 %v2027
        %v2163 = vunpack.c.l.b16 %v2028
        %v2164 = vunpack.c.l.b16 %v2029
        %v2165 = vunpack.c.l.b16 %v2030
        %v2166 = vunpack.c.l.b16 %v2031
        %v2167 = vunpack.c.l.b16 %v2032
        %v2168 = vunpack.c.l.b16 %v2033
        %v2169 = vunpack.c.l.b16 %v2034
        %v2170 = vunpack.c.l.b16 %v2035
        %v2171 = vunpack.c.l.b16 %v2036
        %v2172 = vunpack.c.l.b16 %v2037
        %v2173 = vunpack.c.l.b16 %v2038
        %v2174 = vunpack.c.l.b16 %v2039
        %v2175 = vunpack.c.l.b16 %v2040
        %v2176 = vunpack.c.l.b16 %v2041
        %v2177 = vunpack.c.l.b16 %v2042
        %v2178 = vunpack.c.l.b16 %v2043
        %v2179 = vunpack.c.l.b16 %v2044
        %v2180 = vunpack.c.l.b16 %v2045
        %v2181 = vunpack.c.l.b16 %v2046
        %v2182 = vunpack.c.l.b16 %v2047
        %v2183 = vunpack.c.l.b16 %v2048
        %v2184 = vunpack.c.l.b16 %v2049
        %v2185 = vunpack.c.l.b16 %v2050
        %v2186 = vunpack.c.l.b16 %v2051
        %v2187 = vunpack.c.l.b16 %v2052
        %v2188 = vunpack.c.l.b16 %v2053
        %v2189 = vunpack.c.l.b16 %v2054
        %v2190 = vunpack.c.l.b16 %v2055
        %v2191 = vunpack.c.l.b16 %v2056
        %v2192 = vunpack.c.l.b16 %v2057
        %v2193 = vunpack.c.l.b16 %v2058
        %v2194 = vunpack.c.l.b16 %v2059
        %v2195 = vunpack.c.l.b16 %v2060
        %v2196 = vunpack.c.l.b16 %v2061
        %v2197 = vunpack.c.l.b16 %v2062
        %v2198 = vunpack.c.l.b16 %v2063
        %v2199 = vunpack.c.l.b16 %v2064
        %v2200 = vunpack.c.l.b16 %v2065
        %v2201 = vunpack.c.l.b16 %v2066
        %v2202 = vunpack.c.l.b16 %v2067
        %v2203 = vunpack.c.l.b16 %v2068
        %v2204 = vunpack.c.l.b16 %v2069
        %v2205 = vunpack.c.l.b16 %v2070
        %v2206 = vunpack.c.l.b16 %v2071
        %v2207 = vunpack.c.l.b16 %v2072
        %v2208 = vunpack.c.l.b16 %v2073
        %v2209 = vunpack.c.l.b16 %v2074
        %v2210 = vunpack.c.l.b16 %v2075
        %v2211 = vunpack.c.l.b16 %v2076
        %v2212 = vunpack.c.l.b16 %v2077
        %v2213 = vunpack.c.l.b16 %v2078
        %v2214 = vunpack.c.l.b16 %v2079
        %v2215 = vpack.c.b16 %v2152, %v2151
        %v2216 = vpack.c.b16 %v2154, %v2153
        %v2217 = vpack.c.b16 %v2156, %v2155
        %v2218 = vpack.c.b16 %v2158, %v2157
        %v2219 = vpack.c.b16 %v2160, %v2159
        %v2220 = vpack.c.b16 %v2162, %v2161
        %v2221 = vpack.c.b16 %v2164, %v2163
        %v2222 = vpack.c.b16 %v2166, %v2165
        %v2223 = vpack.c.b16 %v2168, %v2167
        %v2224 = vpack.c.b16 %v2170, %v2169
        %v2225 = vpack.c.b16 %v2172, %v2171
        %v2226 = vpack.c.b16 %v2174, %v2173
        %v2227 = vpack.c.b16 %v2176, %v2175
        %v2228 = vpack.c.b16 %v2178, %v2177
        %v2229 = vpack.c.b16 %v2180, %v2179
        %v2230 = vpack.c.b16 %v2182, %v2181
        %v2231 = vpack.c.b16 %v2184, %v2183
        %v2232 = vpack.c.b16 %v2186, %v2185
        %v2233 = vpack.c.b16 %v2188, %v2187
        %v2234 = vpack.c.b16 %v2190, %v2189
        %v2235 = vpack.c.b16 %v2192, %v2191
        %v2236 = vpack.c.b16 %v2194, %v2193
        %v2237 = vpack.c.b16 %v2196, %v2195
        %v2238 = vpack.c.b16 %v2198, %v2197
        %v2239 = vpack.c.b16 %v2200, %v2199
        %v2240 = vpack.c.b16 %v2202, %v2201
        %v2241 = vpack.c.b16 %v2204, %v2203
        %v2242 = vpack.c.b16 %v2206, %v2205
        %v2243 = vpack.c.b16 %v2208, %v2207
        %v2244 = vpack.c.b16 %v2210, %v2209
        %v2245 = vpack.c.b16 %v2212, %v2211
        %v2246 = vpack.c.b16 %v2214, %v2213
        %2279 = vmatprep.subr.bf16.mxu0 0
        %2280 = vmatpush1.bf16.msra.mxu0 %v2215
        %2281 = vmatprep.subr.bf16.mxu0 0
        %2282 = vmatpush1.bf16.msra.mxu0 %v2216
        %2283 = vmatprep.subr.bf16.mxu0 0
        %2284 = vmatpush1.bf16.msra.mxu0 %v2217
        %2285 = vmatprep.subr.bf16.mxu0 0
        %2286 = vmatpush1.bf16.msra.mxu0 %v2218
        %2287 = vmatprep.subr.bf16.mxu0 0
        %2288 = vmatpush1.bf16.msra.mxu0 %v2219
        %2289 = vmatprep.subr.bf16.mxu0 0
        %2290 = vmatpush1.bf16.msra.mxu0 %v2220
        %2291 = vmatprep.subr.bf16.mxu0 0
        %2292 = vmatpush1.bf16.msra.mxu0 %v2221
        %2293 = vmatprep.subr.bf16.mxu0 0
        %2294 = vmatpush1.bf16.msra.mxu0 %v2222
        %2295 = vmatprep.subr.bf16.mxu0 0
        %2296 = vmatpush1.bf16.msra.mxu0 %v2223
        %2297 = vmatprep.subr.bf16.mxu0 0
        %2298 = vmatpush1.bf16.msra.mxu0 %v2224
        %2299 = vmatprep.subr.bf16.mxu0 0
        %2300 = vmatpush1.bf16.msra.mxu0 %v2225
        %2301 = vmatprep.subr.bf16.mxu0 0
        %2302 = vmatpush1.bf16.msra.mxu0 %v2226
        %2303 = vmatprep.subr.bf16.mxu0 0
        %2304 = vmatpush1.bf16.msra.mxu0 %v2227
        %2305 = vmatprep.subr.bf16.mxu0 0
        %2306 = vmatpush1.bf16.msra.mxu0 %v2228
        %2307 = vmatprep.subr.bf16.mxu0 0
        %2308 = vmatpush1.bf16.msra.mxu0 %v2229
        %2309 = vmatprep.subr.bf16.mxu0 0
        %2310 = vmatpush1.bf16.msra.mxu0 %v2230
        %2311 = vmatprep.mubr.bf16.mxu0 %v2013
        %2312 = vmatmul.mubr.bf16.gmra.mrb[0].mxu0 %v2012
        %v2313 = vpop.f32.mrb[0].mxu0
        %v2314 = vadd.f32 %v2085, %v2313
        %v2315 = vpop.f32.mrb[0].mxu0
        %v2316 = vpop.f32.mrb[0].mxu0
        %v2317 = vadd.f32 %v2085, %v2316
        %v2318 = vpop.f32.mrb[0].mxu0
        %2319 = vdwg.mxu0
        %2320 = vmatprep.subr.bf16.mxu0 0
        %2321 = vmatpush1.bf16.msra.mxu0 %v2231
        %2322 = vmatprep.subr.bf16.mxu0 0
        %2323 = vmatpush1.bf16.msra.mxu0 %v2232
        %2324 = vmatprep.subr.bf16.mxu0 0
        %2325 = vmatpush1.bf16.msra.mxu0 %v2233
        %2326 = vmatprep.subr.bf16.mxu0 0
        %2327 = vmatpush1.bf16.msra.mxu0 %v2234
        %2328 = vmatprep.subr.bf16.mxu0 0
        %2329 = vmatpush1.bf16.msra.mxu0 %v2235
        %2330 = vmatprep.subr.bf16.mxu0 0
        %2331 = vmatpush1.bf16.msra.mxu0 %v2236
        %2332 = vmatprep.subr.bf16.mxu0 0
        %2333 = vmatpush1.bf16.msra.mxu0 %v2237
        %2334 = vmatprep.subr.bf16.mxu0 0
        %2335 = vmatpush1.bf16.msra.mxu0 %v2238
        %2336 = vmatprep.subr.bf16.mxu0 0
        %2337 = vmatpush1.bf16.msra.mxu0 %v2239
        %2338 = vmatprep.subr.bf16.mxu0 0
        %2339 = vmatpush1.bf16.msra.mxu0 %v2240
        %2340 = vmatprep.subr.bf16.mxu0 0
        %2341 = vmatpush1.bf16.msra.mxu0 %v2241
        %2342 = vmatprep.subr.bf16.mxu0 0
        %2343 = vmatpush1.bf16.msra.mxu0 %v2242
        %2344 = vmatprep.subr.bf16.mxu0 0
        %2345 = vmatpush1.bf16.msra.mxu0 %v2243
        %2346 = vmatprep.subr.bf16.mxu0 0
        %2347 = vmatpush1.bf16.msra.mxu0 %v2244
        %2348 = vmatprep.subr.bf16.mxu0 0
        %2349 = vmatpush1.bf16.msra.mxu0 %v2245
        %2350 = vmatprep.subr.bf16.mxu0 0
        %2351 = vmatpush1.bf16.msra.mxu0 %v2246
        %2352 = vmatprep.mubr.bf16.mxu0 %v2015
        %2353 = vmatmul.mubr.bf16.gmra.mrb[0].mxu0 %v2014
        %v2354 = vpop.f32.mrb[0].mxu0
        %v2355 = vadd.f32 %v2314, %v2354
        %v2356 = vpop.f32.mrb[0].mxu0
        %v2357 = vpop.f32.mrb[0].mxu0
        %v2358 = vadd.f32 %v2317, %v2357
        %v2359 = vpop.f32.mrb[0].mxu0
        %2360 = vdwg.mxu0
        %2361 = vst.msk [vmem:[%s543] sm:$0xff] %vm1430, %v2355
        %2362 = vst.msk [vmem:[%s543 + $0x8] sm:$0xff] %vm1430, %v2358
        %s2363 = sand.u32 %s278, 1
        %s2364 = scalar_lea.sflag [#allocation8], %s2363
        %s2365 = sand.u32 %s278, 1
        %s2366 = smul.addr %s2365, 16
        %s2367 = scalar_lea.vmem [#allocation23], %s2366
        // Predicated region
        $region105: #{tpu_custom_call.1} parent=59 // pred_check
          %p2368 = pneg %p288
        $region106: #{tpu_custom_call.1} parent=59 // pred_check_branch
          %2370 = sbr.rel (%p2368) target = $region108
        $region107: #{tpu_custom_call.1} parent=59 // pred_region
          %s2371 = smul.u32 2, %s39
          %s2373 = ssub.s32 256, 256
          %2374 = vsyncadd %s2364, %s2373
          %s2375 = smul.addr %s38, 2
          %s2376 = sadd.s32 %s2371, %s2375
          %s2377 = smul.addr %s2376, 128
          %s2378 = scalar_lea.hbm %s10, %s2377
          %s2379 = sshll.u32 %s2367, 4
          %s2380 = int_to_ptr.vmem [resolvable:$true] %s2379
          %2385 = dma.vmem_to_hbm [thread:$0]  %s2380, 256, %s2378, %s2364, 128, 128, 8
        $region108: #{tpu_custom_call.1} parent=59 // pred_fallthru
          _
      $region60: #{tpu_custom_call.1} parent=5 // pred_fallthru
        _
      %p2386 = scmp.le.s32.totalorder 2, %s29
      // Predicated region
      $region109: #{tpu_custom_call.1} parent=5 // pred_check
        %p2387 = pneg %p2386
      $region110: #{tpu_custom_call.1} parent=5 // pred_check_branch
        %2389 = sbr.rel (%p2387) target = $region112
      $region111: #{tpu_custom_call.1} parent=5 // pred_region
        %s2390 = ssub.s32 %s29, 2
        // Predicated region
        $region113: #{tpu_custom_call.1} parent=111 // pred_check
          %p2391 = pneg %p294
        $region114: #{tpu_custom_call.1} parent=111 // pred_check_branch
          %2393 = sbr.rel (%p2391) target = $region116
        $region115: #{tpu_custom_call.1} parent=111 // pred_region
          %s2394 = sand.u32 %s279, 1
          %s2395 = scalar_lea.sflag [#allocation8], %s2394
          %s2396 = sand.u32 %s279, 1
          %s2397 = smul.addr %s2396, 16
          %s2398 = scalar_lea.vmem [#allocation23], %s2397
          %2399 = dma.done %s2395, 256
        $region116: #{tpu_custom_call.1} parent=111 // pred_fallthru
          _
      $region112: #{tpu_custom_call.1} parent=5 // pred_fallthru
        _
    $region6: #{tpu_custom_call.1} parent=1 // loop_footer
      %s33 = sadd.s32 1, %s29
    $region7: #{tpu_custom_call.1} parent=1 // loop_footer_branch
      %28 = sbr.rel target = $region3
    $region8: #{tpu_custom_call.1} parent=1 // loop_exit
      _
    %2400 = vsyncpa [#allocation7], 1
    %s2401 = scalar_lea.sflag [#allocation7], 1
    %2402 = vsyncpa %s2401, 1
    %2403 = vsyncpa [#allocation10], 1
    %s2404 = scalar_lea.sflag [#allocation10], 1
    %2405 = vsyncpa %s2404, 1
    %2406 = vsyncpa [#allocation13], 1
    %2407 = vsyncpa [#allocation16], 1
    %2408 = vsyncpa [#allocation19], 1
    %2409 = vsyncpa [#allocation22], 1
    %2410 = vsyncpa [#allocation8], 1
    %s2411 = scalar_lea.sflag [#allocation8], 1
    %2412 = vsyncpa %s2411, 1

</llo_original>
